<compile_context>
chip_gen: v7x
topology: tpu7x:2x2x1
jax: 0.10.0
libtpu: 0.0.40
codegen_flags: <defaults>
</compile_context>

<pallas_src>
import functools

import numpy as np
import jax
import jax.numpy as jnp
from jax.experimental import pallas as pl
from jax.experimental.pallas import tpu as pltpu

# ----------------------------- config (small, consistent with module) ---------------------------
B = 2          # batch
N = 8          # sequence length
D_HIDN = 32    # d_hidn
HEADS = 4      # attn_head
D_HEAD = 8     # d_head  (inner_dim = HEADS * D_HEAD = 32)
D_FF = 64      # d_ff
N_LAYER = 2    # n_layer
LN_EPS = 1e-5
_INV_SQRT2 = 0.7071067811865475

WEIGHT_ORDER = ("ln1_g", "ln1_b", "w_qkv", "w_out", "b_out",
                "ln2_g", "ln2_b", "w1", "b1", "w2", "b2")
N_WEIGHTS = len(WEIGHT_ORDER)


# ----------------------------------------- Pallas kernel ----------------------------------------
def _layer_norm(x, g, b):
    mu = jnp.mean(x, axis=-1, keepdims=True)
    var = jnp.mean((x - mu) ** 2, axis=-1, keepdims=True)
    return (x - mu) * jax.lax.rsqrt(var + LN_EPS) * g + b


def _transformer_kernel(x_ref, mask_ref, *rest, n_layer, heads, d_head, batch, seq):
    """Full transformer stack for the whole (folded) batch in one invocation.

    x_ref:    (B*N, D) f32 activations.
    mask_ref: (heads*B*N, B*N) f32 additive block-diagonal mask (tiled over heads).
    rest:     n_layer * 11 weight refs (matmul weights in bf16, LN params / biases in f32),
              followed by the output ref.
    """
    o_ref = rest[-1]
    w_refs = rest[:-1]

    bn = batch * seq
    inner = heads * d_head
    x = x_ref[...]                      # (BN, D) f32 residual stream
    mask_bias = mask_ref[...]           # (H*BN, BN) f32

    for l in range(n_layer):            # static unroll over layers
        (ln1g, ln1b, wqkv, wout, bout,
         ln2g, ln2b, w1, b1, w2, b2) = w_refs[l * N_WEIGHTS:(l + 1) * N_WEIGHTS]

        # ---------------- PreNorm + Attention ----------------
        xn = _layer_norm(x, ln1g[...], ln1b[...])                         # (BN, D) f32
        # Q columns of wqkv already carry the attention scale (folded at param-prep time).
        qkv = jnp.dot(xn.astype(jnp.bfloat16), wqkv[...],
                      preferred_element_type=jnp.float32)                 # (BN, 3*inner) f32
        qkv_bf = qkv.astype(jnp.bfloat16)

        # Breadth-first heads: all score matmuls first...
        s_list = []
        for h in range(heads):
            q_h = qkv_bf[:, h * d_head:(h + 1) * d_head]                              # (BN, dh)
            k_h = qkv_bf[:, inner + h * d_head: inner + (h + 1) * d_head]             # (BN, dh)
            s_h = jax.lax.dot_general(q_h, k_h, (((1,), (1,)), ((), ())),
                                      preferred_element_type=jnp.float32)             # (BN, BN)
            s_list.append(s_h)

        # ...ONE fused softmax over the stacked scores (unnormalized)...
        s_all = jnp.concatenate(s_list, axis=0) + mask_bias               # (H*BN, BN) f32
        s_all = s_all - jnp.max(s_all, axis=-1, keepdims=True)
        p_all = jnp.exp(s_all)
        inv_l = pl.reciprocal(jnp.sum(p_all, axis=-1, keepdims=True), approx=True)    # (H*BN, 1)
        p_bf = p_all.astype(jnp.bfloat16)

        # ...then all ctx matmuls; normalization deferred to a tiny per-head multiply.
        ctx_list = []
        for h in range(heads):
            v_h = qkv_bf[:, 2 * inner + h * d_head: 2 * inner + (h + 1) * d_head]     # (BN, dh)
            ctx_h = jnp.dot(p_bf[h * bn:(h + 1) * bn, :], v_h,
                            preferred_element_type=jnp.float32)                       # (BN, dh)
            ctx_list.append(ctx_h * inv_l[h * bn:(h + 1) * bn, :])

        # Merged output projection: one (BN, inner) @ (inner, D) matmul.
        ctx = jnp.concatenate(ctx_list, axis=1).astype(jnp.bfloat16)      # (BN, inner)
        attn_out = jnp.dot(ctx, wout[...], preferred_element_type=jnp.float32)        # (BN, D)
        x = x + attn_out + bout[...]                                      # residual (+ to_out bias)

        # ---------------- PreNorm + FeedForward ----------------
        xn2 = _layer_norm(x, ln2g[...], ln2b[...])
        h1 = jnp.dot(xn2.astype(jnp.bfloat16), w1[...],
                     preferred_element_type=jnp.float32) + b1[...]        # (BN, F) f32
        g = 0.5 * h1 * (1.0 + jax.lax.erf(h1 * _INV_SQRT2))               # exact GELU (nn.GELU)
        x = x + jnp.dot(g.astype(jnp.bfloat16), w2[...],
                        preferred_element_type=jnp.float32) + b2[...]

    o_ref[...] = x


# --------------------------------------- wrapper -------------------------------------------------
def transformer_forward(x, flat_weights, *, n_layer=N_LAYER, heads=HEADS, d_head=D_HEAD):
    Bb, Nn, Dd = x.shape
    bn = Bb * Nn
    x2 = x.reshape(bn, Dd)

    # Additive block-diagonal mask (rows attend only within their own batch element), tiled over
    # heads. Built with numpy at trace time -> an XLA constant, no in-kernel iota/where work.
    row_b = np.arange(bn)[:, None] // Nn
    col_b = np.arange(bn)[None, :] // Nn
    mask = np.where(row_b == col_b, 0.0, -1e30).astype(np.float32)
    mask = jnp.asarray(np.tile(mask, (heads, 1)))                          # (heads*BN, BN)

    kernel = functools.partial(_transformer_kernel, n_layer=n_layer, heads=heads,
                               d_head=d_head, batch=Bb, seq=Nn)
    n_in = 2 + len(flat_weights)
    out = pl.pallas_call(
        kernel,
        out_shape=jax.ShapeDtypeStruct((bn, Dd), x.dtype),
        # No grid / tiling: total resident footprint ~60 KB, single invocation is optimal.
        in_specs=[pl.BlockSpec(memory_space=pltpu.MemorySpace.VMEM)] * n_in,
        out_specs=pl.BlockSpec(memory_space=pltpu.MemorySpace.VMEM),
    )(x2, mask, *flat_weights)
    return out.reshape(Bb, Nn, Dd)


def prepare_params(params, heads=HEADS, d_head=D_HEAD):
    """Flatten per-layer params, fold the attention scale into the Q columns of w_qkv (in f32),
    and pre-cast all matmul weight matrices to bf16 (one-time, off the critical path)."""
    inner = heads * d_head
    scale = d_head ** (-0.5)
    flat = []
    for p in params:
        p = dict(p)
        wqkv = p["w_qkv"]
        wqkv = jnp.concatenate([wqkv[:, :inner] * scale, wqkv[:, inner:]], axis=-1)
        p["w_qkv"] = wqkv.astype(jnp.bfloat16)
        p["w_out"] = p["w_out"].astype(jnp.bfloat16)
        p["w1"] = p["w1"].astype(jnp.bfloat16)
        p["w2"] = p["w2"].astype(jnp.bfloat16)
        flat.extend(p[k] for k in WEIGHT_ORDER)
    return flat


# ----------------------------------- pure-JAX reference -----------------------------------------
def _ref_layer(x, p, heads, d_head):
    def ln(t, g, b):
        mu = t.mean(-1, keepdims=True)
        var = ((t - mu) ** 2).mean(-1, keepdims=True)
        return (t - mu) * jax.lax.rsqrt(var + LN_EPS) * g + b

    Bb, Nn, Dd = x.shape
    inner = heads * d_head
    scale = d_head ** (-0.5)

    xn = ln(x, p["ln1_g"], p["ln1_b"])
    qkv = xn @ p["w_qkv"]
    q, k, v = jnp.split(qkv, 3, axis=-1)

    def split_heads(t):
        return t.reshape(Bb, Nn, heads, d_head).transpose(0, 2, 1, 3)

    q, k, v = map(split_heads, (q, k, v))
    s = jnp.einsum("bhnd,bhmd->bhnm", q, k) * scale
    attn = jax.nn.softmax(s, axis=-1)
    o = jnp.einsum("bhnm,bhmd->bhnd", attn, v).transpose(0, 2, 1, 3).reshape(Bb, Nn, inner)
    x = x + o @ p["w_out"] + p["b_out"]

    xn2 = ln(x, p["ln2_g"], p["ln2_b"])
    h1 = xn2 @ p["w1"] + p["b1"]
    g = 0.5 * h1 * (1.0 + jax.lax.erf(h1 * _INV_SQRT2))
    return x + g @ p["w2"] + p["b2"]


def transformer_forward_ref(x, params, heads=HEADS, d_head=D_HEAD):
    for layer_params in params:
        x = _ref_layer(x, layer_params, heads, d_head)
    return x


# ------------------------------------- parameter init -------------------------------------------
def init_params(key, n_layer, d_hidn, heads, d_head, d_ff):
    inner = heads * d_head
    params = []
    for _ in range(n_layer):
        keys = jax.random.split(key, 8)
        key = keys[0]
        layer = {
            "ln1_g": 1.0 + 0.05 * jax.random.normal(keys[1], (1, d_hidn), jnp.float32),
            "ln1_b": 0.05 * jax.random.normal(keys[2], (1, d_hidn), jnp.float32),
            "ln2_g": 1.0 + 0.05 * jax.random.normal(keys[3], (1, d_hidn), jnp.float32),
            "ln2_b": 0.05 * jax.random.normal(keys[4], (1, d_hidn), jnp.float32),
            "w_qkv": 0.02 * jax.random.normal(keys[5], (d_hidn, 3 * inner), jnp.float32),
            "w_out": 0.02 * jax.random.normal(keys[6], (inner, d_hidn), jnp.float32),
            "b_out": 0.02 * jax.random.normal(keys[7], (1, d_hidn), jnp.float32),
        }
        keys2 = jax.random.split(key, 5)
        key = keys2[0]
        layer.update({
            "w1": 0.02 * jax.random.normal(keys2[1], (d_hidn, d_ff), jnp.float32),
            "b1": 0.02 * jax.random.normal(keys2[2], (1, d_ff), jnp.float32),
            "w2": 0.02 * jax.random.normal(keys2[3], (d_ff, d_hidn), jnp.float32),
            "b2": 0.02 * jax.random.normal(keys2[4], (1, d_hidn), jnp.float32),
        })
        params.append(layer)
    return params


# ----------------------------------------------- main -------------------------------------------
if __name__ == "__main__":
    key = jax.random.PRNGKey(0)
    kx, kp = jax.random.split(key)
    x = jax.random.normal(kx, (B, N, D_HIDN), jnp.float32)
    params = init_params(kp, N_LAYER, D_HIDN, HEADS, D_HEAD, D_FF)
    flat_weights = prepare_params(params)          # one-time: scale fold + bf16 weight cast

    fwd = jax.jit(transformer_forward)
    out = jax.block_until_ready(fwd(x, flat_weights))
    ref = jax.block_until_ready(transformer_forward_ref(x, params))

    assert out.shape == (B, N, D_HIDN), out.shape
    if not jnp.allclose(out, ref, atol=2e-3, rtol=2e-3):
        max_err = jnp.max(jnp.abs(out - ref))
        raise AssertionError(f"Pallas output mismatch, max abs err = {max_err}")

    print("KERNEL_OK")
</pallas_src>

<mosaic_0001>
module attributes {stable_mosaic.version = 11 : i64} {
  func.func @_transformer_kernel(%arg0: memref<16x32xf32, #tpu.memory_space<vmem>>, %arg1: memref<64x16xf32, #tpu.memory_space<vmem>>, %arg2: memref<1x32xf32, #tpu.memory_space<vmem>>, %arg3: memref<1x32xf32, #tpu.memory_space<vmem>>, %arg4: memref<32x96xbf16, #tpu.memory_space<vmem>>, %arg5: memref<32x32xbf16, #tpu.memory_space<vmem>>, %arg6: memref<1x32xf32, #tpu.memory_space<vmem>>, %arg7: memref<1x32xf32, #tpu.memory_space<vmem>>, %arg8: memref<1x32xf32, #tpu.memory_space<vmem>>, %arg9: memref<32x64xbf16, #tpu.memory_space<vmem>>, %arg10: memref<1x64xf32, #tpu.memory_space<vmem>>, %arg11: memref<64x32xbf16, #tpu.memory_space<vmem>>, %arg12: memref<1x32xf32, #tpu.memory_space<vmem>>, %arg13: memref<1x32xf32, #tpu.memory_space<vmem>>, %arg14: memref<1x32xf32, #tpu.memory_space<vmem>>, %arg15: memref<32x96xbf16, #tpu.memory_space<vmem>>, %arg16: memref<32x32xbf16, #tpu.memory_space<vmem>>, %arg17: memref<1x32xf32, #tpu.memory_space<vmem>>, %arg18: memref<1x32xf32, #tpu.memory_space<vmem>>, %arg19: memref<1x32xf32, #tpu.memory_space<vmem>>, %arg20: memref<32x64xbf16, #tpu.memory_space<vmem>>, %arg21: memref<1x64xf32, #tpu.memory_space<vmem>>, %arg22: memref<64x32xbf16, #tpu.memory_space<vmem>>, %arg23: memref<1x32xf32, #tpu.memory_space<vmem>>, %arg24: memref<16x32xf32, #tpu.memory_space<vmem>>) attributes {dimension_semantics = [], scalar_prefetch = 0 : i64, scratch_operands = 0 : i64, tpu.core_type = #tpu.core_type<tc>} {
    %c0 = arith.constant 0 : index
    %c0_0 = arith.constant 0 : index
    %0 = vector.load %arg0[%c0, %c0_0] : memref<16x32xf32, #tpu.memory_space<vmem>>, vector<16x32xf32>
    %c0_1 = arith.constant 0 : index
    %c0_2 = arith.constant 0 : index
    %1 = vector.load %arg1[%c0_1, %c0_2] : memref<64x16xf32, #tpu.memory_space<vmem>>, vector<64x16xf32>
    %c0_3 = arith.constant 0 : index
    %c0_4 = arith.constant 0 : index
    %2 = vector.load %arg2[%c0_3, %c0_4] : memref<1x32xf32, #tpu.memory_space<vmem>>, vector<1x32xf32>
    %c0_5 = arith.constant 0 : index
    %c0_6 = arith.constant 0 : index
    %3 = vector.load %arg3[%c0_5, %c0_6] : memref<1x32xf32, #tpu.memory_space<vmem>>, vector<1x32xf32>
    %cst = arith.constant dense<0.000000e+00> : vector<16xf32>
    %4 = vector.multi_reduction <add>, %0, %cst [1] : vector<16x32xf32> to vector<16xf32>
    %5 = vector.shape_cast %4 : vector<16xf32> to vector<16x1xf32>
    %cst_7 = arith.constant 3.200000e+01 : f32
    %6 = vector.broadcast %cst_7 : f32 to vector<16x1xf32>
    %7 = arith.divf %5, %6 : vector<16x1xf32>
    %8 = vector.broadcast %7 : vector<16x1xf32> to vector<16x32xf32>
    %9 = arith.subf %0, %8 : vector<16x32xf32>
    %10 = arith.mulf %9, %9 : vector<16x32xf32>
    %cst_8 = arith.constant dense<0.000000e+00> : vector<16xf32>
    %11 = vector.multi_reduction <add>, %10, %cst_8 [1] : vector<16x32xf32> to vector<16xf32>
    %12 = vector.shape_cast %11 : vector<16xf32> to vector<16x1xf32>
    %cst_9 = arith.constant 3.200000e+01 : f32
    %13 = vector.broadcast %cst_9 : f32 to vector<16x1xf32>
    %14 = arith.divf %12, %13 : vector<16x1xf32>
    %15 = vector.broadcast %7 : vector<16x1xf32> to vector<16x32xf32>
    %16 = arith.subf %0, %15 : vector<16x32xf32>
    %cst_10 = arith.constant 9.99999974E-6 : f32
    %17 = vector.broadcast %cst_10 : f32 to vector<16x1xf32>
    %18 = arith.addf %14, %17 : vector<16x1xf32>
    %19 = math.rsqrt %18 : vector<16x1xf32>
    %20 = vector.broadcast %19 : vector<16x1xf32> to vector<16x32xf32>
    %21 = arith.mulf %16, %20 : vector<16x32xf32>
    %22 = vector.broadcast %2 : vector<1x32xf32> to vector<16x32xf32>
    %23 = arith.mulf %21, %22 : vector<16x32xf32>
    %24 = vector.broadcast %3 : vector<1x32xf32> to vector<16x32xf32>
    %25 = arith.addf %23, %24 : vector<16x32xf32>
    %26 = arith.truncf %25 : vector<16x32xf32> to vector<16x32xbf16>
    %c0_11 = arith.constant 0 : index
    %c0_12 = arith.constant 0 : index
    %27 = vector.load %arg4[%c0_11, %c0_12] : memref<32x96xbf16, #tpu.memory_space<vmem>>, vector<32x96xbf16>
    %cst_13 = arith.constant dense<0.000000e+00> : vector<16x96xf32>
    %28 = tpu.matmul %26, %27, %cst_13 {dimension_numbers = #tpu.dot_dimension_numbers<[1], [0], [0], [1], [0, 0, 1, 1], [], []>} : vector<16x32xbf16>, vector<32x96xbf16>, vector<16x96xf32> -> vector<16x96xf32>
    %29 = arith.truncf %28 : vector<16x96xf32> to vector<16x96xbf16>
    %30 = vector.extract_strided_slice %29 {offsets = [0, 0], sizes = [16, 8], strides = [1, 1]} : vector<16x96xbf16> to vector<16x8xbf16>
    %31 = vector.extract_strided_slice %29 {offsets = [0, 32], sizes = [16, 8], strides = [1, 1]} : vector<16x96xbf16> to vector<16x8xbf16>
    %cst_14 = arith.constant dense<0.000000e+00> : vector<16x16xf32>
    %32 = tpu.matmul %30, %31, %cst_14 {dimension_numbers = #tpu.dot_dimension_numbers<[1], [1], [0], [0], [0, 0, 1, 0], [], []>} : vector<16x8xbf16>, vector<16x8xbf16>, vector<16x16xf32> -> vector<16x16xf32>
    %33 = vector.extract_strided_slice %29 {offsets = [0, 8], sizes = [16, 8], strides = [1, 1]} : vector<16x96xbf16> to vector<16x8xbf16>
    %34 = vector.extract_strided_slice %29 {offsets = [0, 40], sizes = [16, 8], strides = [1, 1]} : vector<16x96xbf16> to vector<16x8xbf16>
    %cst_15 = arith.constant dense<0.000000e+00> : vector<16x16xf32>
    %35 = tpu.matmul %33, %34, %cst_15 {dimension_numbers = #tpu.dot_dimension_numbers<[1], [1], [0], [0], [0, 0, 1, 0], [], []>} : vector<16x8xbf16>, vector<16x8xbf16>, vector<16x16xf32> -> vector<16x16xf32>
    %36 = vector.extract_strided_slice %29 {offsets = [0, 16], sizes = [16, 8], strides = [1, 1]} : vector<16x96xbf16> to vector<16x8xbf16>
    %37 = vector.extract_strided_slice %29 {offsets = [0, 48], sizes = [16, 8], strides = [1, 1]} : vector<16x96xbf16> to vector<16x8xbf16>
    %cst_16 = arith.constant dense<0.000000e+00> : vector<16x16xf32>
    %38 = tpu.matmul %36, %37, %cst_16 {dimension_numbers = #tpu.dot_dimension_numbers<[1], [1], [0], [0], [0, 0, 1, 0], [], []>} : vector<16x8xbf16>, vector<16x8xbf16>, vector<16x16xf32> -> vector<16x16xf32>
    %39 = vector.extract_strided_slice %29 {offsets = [0, 24], sizes = [16, 8], strides = [1, 1]} : vector<16x96xbf16> to vector<16x8xbf16>
    %40 = vector.extract_strided_slice %29 {offsets = [0, 56], sizes = [16, 8], strides = [1, 1]} : vector<16x96xbf16> to vector<16x8xbf16>
    %cst_17 = arith.constant dense<0.000000e+00> : vector<16x16xf32>
    %41 = tpu.matmul %39, %40, %cst_17 {dimension_numbers = #tpu.dot_dimension_numbers<[1], [1], [0], [0], [0, 0, 1, 0], [], []>} : vector<16x8xbf16>, vector<16x8xbf16>, vector<16x16xf32> -> vector<16x16xf32>
    %42 = tpu.concatenate %32, %35, %38, %41 in 0 : vector<16x16xf32>, vector<16x16xf32>, vector<16x16xf32>, vector<16x16xf32> -> vector<64x16xf32>
    %43 = arith.addf %42, %1 : vector<64x16xf32>
    %cst_18 = arith.constant dense<0xFF800000> : vector<64xf32>
    %44 = vector.multi_reduction <maximumf>, %43, %cst_18 [1] : vector<64x16xf32> to vector<64xf32>
    %45 = vector.shape_cast %44 : vector<64xf32> to vector<64x1xf32>
    %46 = vector.broadcast %45 : vector<64x1xf32> to vector<64x16xf32>
    %47 = arith.subf %43, %46 : vector<64x16xf32>
    %48 = math.exp %47 : vector<64x16xf32>
    %cst_19 = arith.constant dense<0.000000e+00> : vector<64xf32>
    %49 = vector.multi_reduction <add>, %48, %cst_19 [1] : vector<64x16xf32> to vector<64xf32>
    %50 = vector.shape_cast %49 : vector<64xf32> to vector<64x1xf32>
    %51 = tpu.reciprocal %50 {approx = true} : vector<64x1xf32> -> vector<64x1xf32>
    %52 = arith.truncf %48 : vector<64x16xf32> to vector<64x16xbf16>
    %53 = vector.extract_strided_slice %29 {offsets = [0, 64], sizes = [16, 8], strides = [1, 1]} : vector<16x96xbf16> to vector<16x8xbf16>
    %54 = vector.extract_strided_slice %52 {offsets = [0, 0], sizes = [16, 16], strides = [1, 1]} : vector<64x16xbf16> to vector<16x16xbf16>
    %cst_20 = arith.constant dense<0.000000e+00> : vector<16x8xf32>
    %55 = tpu.matmul %54, %53, %cst_20 {dimension_numbers = #tpu.dot_dimension_numbers<[1], [0], [0], [1], [0, 0, 1, 1], [], []>} : vector<16x16xbf16>, vector<16x8xbf16>, vector<16x8xf32> -> vector<16x8xf32>
    %56 = vector.extract_strided_slice %51 {offsets = [0, 0], sizes = [16, 1], strides = [1, 1]} : vector<64x1xf32> to vector<16x1xf32>
    %57 = vector.broadcast %56 : vector<16x1xf32> to vector<16x8xf32>
    %58 = arith.mulf %55, %57 : vector<16x8xf32>
    %59 = vector.extract_strided_slice %29 {offsets = [0, 72], sizes = [16, 8], strides = [1, 1]} : vector<16x96xbf16> to vector<16x8xbf16>
    %60 = vector.extract_strided_slice %52 {offsets = [16, 0], sizes = [16, 16], strides = [1, 1]} : vector<64x16xbf16> to vector<16x16xbf16>
    %cst_21 = arith.constant dense<0.000000e+00> : vector<16x8xf32>
    %61 = tpu.matmul %60, %59, %cst_21 {dimension_numbers = #tpu.dot_dimension_numbers<[1], [0], [0], [1], [0, 0, 1, 1], [], []>} : vector<16x16xbf16>, vector<16x8xbf16>, vector<16x8xf32> -> vector<16x8xf32>
    %62 = vector.extract_strided_slice %51 {offsets = [16, 0], sizes = [16, 1], strides = [1, 1]} : vector<64x1xf32> to vector<16x1xf32>
    %63 = vector.broadcast %62 : vector<16x1xf32> to vector<16x8xf32>
    %64 = arith.mulf %61, %63 : vector<16x8xf32>
    %65 = vector.extract_strided_slice %29 {offsets = [0, 80], sizes = [16, 8], strides = [1, 1]} : vector<16x96xbf16> to vector<16x8xbf16>
    %66 = vector.extract_strided_slice %52 {offsets = [32, 0], sizes = [16, 16], strides = [1, 1]} : vector<64x16xbf16> to vector<16x16xbf16>
    %cst_22 = arith.constant dense<0.000000e+00> : vector<16x8xf32>
    %67 = tpu.matmul %66, %65, %cst_22 {dimension_numbers = #tpu.dot_dimension_numbers<[1], [0], [0], [1], [0, 0, 1, 1], [], []>} : vector<16x16xbf16>, vector<16x8xbf16>, vector<16x8xf32> -> vector<16x8xf32>
    %68 = vector.extract_strided_slice %51 {offsets = [32, 0], sizes = [16, 1], strides = [1, 1]} : vector<64x1xf32> to vector<16x1xf32>
    %69 = vector.broadcast %68 : vector<16x1xf32> to vector<16x8xf32>
    %70 = arith.mulf %67, %69 : vector<16x8xf32>
    %71 = vector.extract_strided_slice %29 {offsets = [0, 88], sizes = [16, 8], strides = [1, 1]} : vector<16x96xbf16> to vector<16x8xbf16>
    %72 = vector.extract_strided_slice %52 {offsets = [48, 0], sizes = [16, 16], strides = [1, 1]} : vector<64x16xbf16> to vector<16x16xbf16>
    %cst_23 = arith.constant dense<0.000000e+00> : vector<16x8xf32>
    %73 = tpu.matmul %72, %71, %cst_23 {dimension_numbers = #tpu.dot_dimension_numbers<[1], [0], [0], [1], [0, 0, 1, 1], [], []>} : vector<16x16xbf16>, vector<16x8xbf16>, vector<16x8xf32> -> vector<16x8xf32>
    %74 = vector.extract_strided_slice %51 {offsets = [48, 0], sizes = [16, 1], strides = [1, 1]} : vector<64x1xf32> to vector<16x1xf32>
    %75 = vector.broadcast %74 : vector<16x1xf32> to vector<16x8xf32>
    %76 = arith.mulf %73, %75 : vector<16x8xf32>
    %77 = tpu.concatenate %58, %64, %70, %76 in 1 : vector<16x8xf32>, vector<16x8xf32>, vector<16x8xf32>, vector<16x8xf32> -> vector<16x32xf32>
    %78 = arith.truncf %77 : vector<16x32xf32> to vector<16x32xbf16>
    %c0_24 = arith.constant 0 : index
    %c0_25 = arith.constant 0 : index
    %79 = vector.load %arg5[%c0_24, %c0_25] : memref<32x32xbf16, #tpu.memory_space<vmem>>, vector<32x32xbf16>
    %cst_26 = arith.constant dense<0.000000e+00> : vector<16x32xf32>
    %80 = tpu.matmul %78, %79, %cst_26 {dimension_numbers = #tpu.dot_dimension_numbers<[1], [0], [0], [1], [0, 0, 1, 1], [], []>} : vector<16x32xbf16>, vector<32x32xbf16>, vector<16x32xf32> -> vector<16x32xf32>
    %81 = arith.addf %0, %80 : vector<16x32xf32>
    %c0_27 = arith.constant 0 : index
    %c0_28 = arith.constant 0 : index
    %82 = vector.load %arg6[%c0_27, %c0_28] : memref<1x32xf32, #tpu.memory_space<vmem>>, vector<1x32xf32>
    %83 = vector.broadcast %82 : vector<1x32xf32> to vector<16x32xf32>
    %84 = arith.addf %81, %83 : vector<16x32xf32>
    %c0_29 = arith.constant 0 : index
    %c0_30 = arith.constant 0 : index
    %85 = vector.load %arg7[%c0_29, %c0_30] : memref<1x32xf32, #tpu.memory_space<vmem>>, vector<1x32xf32>
    %c0_31 = arith.constant 0 : index
    %c0_32 = arith.constant 0 : index
    %86 = vector.load %arg8[%c0_31, %c0_32] : memref<1x32xf32, #tpu.memory_space<vmem>>, vector<1x32xf32>
    %cst_33 = arith.constant dense<0.000000e+00> : vector<16xf32>
    %87 = vector.multi_reduction <add>, %84, %cst_33 [1] : vector<16x32xf32> to vector<16xf32>
    %88 = vector.shape_cast %87 : vector<16xf32> to vector<16x1xf32>
    %cst_34 = arith.constant 3.200000e+01 : f32
    %89 = vector.broadcast %cst_34 : f32 to vector<16x1xf32>
    %90 = arith.divf %88, %89 : vector<16x1xf32>
    %91 = vector.broadcast %90 : vector<16x1xf32> to vector<16x32xf32>
    %92 = arith.subf %84, %91 : vector<16x32xf32>
    %93 = arith.mulf %92, %92 : vector<16x32xf32>
    %cst_35 = arith.constant dense<0.000000e+00> : vector<16xf32>
    %94 = vector.multi_reduction <add>, %93, %cst_35 [1] : vector<16x32xf32> to vector<16xf32>
    %95 = vector.shape_cast %94 : vector<16xf32> to vector<16x1xf32>
    %cst_36 = arith.constant 3.200000e+01 : f32
    %96 = vector.broadcast %cst_36 : f32 to vector<16x1xf32>
    %97 = arith.divf %95, %96 : vector<16x1xf32>
    %98 = vector.broadcast %90 : vector<16x1xf32> to vector<16x32xf32>
    %99 = arith.subf %84, %98 : vector<16x32xf32>
    %cst_37 = arith.constant 9.99999974E-6 : f32
    %100 = vector.broadcast %cst_37 : f32 to vector<16x1xf32>
    %101 = arith.addf %97, %100 : vector<16x1xf32>
    %102 = math.rsqrt %101 : vector<16x1xf32>
    %103 = vector.broadcast %102 : vector<16x1xf32> to vector<16x32xf32>
    %104 = arith.mulf %99, %103 : vector<16x32xf32>
    %105 = vector.broadcast %85 : vector<1x32xf32> to vector<16x32xf32>
    %106 = arith.mulf %104, %105 : vector<16x32xf32>
    %107 = vector.broadcast %86 : vector<1x32xf32> to vector<16x32xf32>
    %108 = arith.addf %106, %107 : vector<16x32xf32>
    %109 = arith.truncf %108 : vector<16x32xf32> to vector<16x32xbf16>
    %c0_38 = arith.constant 0 : index
    %c0_39 = arith.constant 0 : index
    %110 = vector.load %arg9[%c0_38, %c0_39] : memref<32x64xbf16, #tpu.memory_space<vmem>>, vector<32x64xbf16>
    %cst_40 = arith.constant dense<0.000000e+00> : vector<16x64xf32>
    %111 = tpu.matmul %109, %110, %cst_40 {dimension_numbers = #tpu.dot_dimension_numbers<[1], [0], [0], [1], [0, 0, 1, 1], [], []>} : vector<16x32xbf16>, vector<32x64xbf16>, vector<16x64xf32> -> vector<16x64xf32>
    %c0_41 = arith.constant 0 : index
    %c0_42 = arith.constant 0 : index
    %112 = vector.load %arg10[%c0_41, %c0_42] : memref<1x64xf32, #tpu.memory_space<vmem>>, vector<1x64xf32>
    %113 = vector.broadcast %112 : vector<1x64xf32> to vector<16x64xf32>
    %114 = arith.addf %111, %113 : vector<16x64xf32>
    %cst_43 = arith.constant 5.000000e-01 : f32
    %115 = vector.broadcast %cst_43 : f32 to vector<16x64xf32>
    %116 = arith.mulf %115, %114 : vector<16x64xf32>
    %cst_44 = arith.constant 0.707106769 : f32
    %117 = vector.broadcast %cst_44 : f32 to vector<16x64xf32>
    %118 = arith.mulf %114, %117 : vector<16x64xf32>
    %119 = math.erf %118 : vector<16x64xf32>
    %cst_45 = arith.constant 1.000000e+00 : f32
    %120 = vector.broadcast %cst_45 : f32 to vector<16x64xf32>
    %121 = arith.addf %120, %119 : vector<16x64xf32>
    %122 = arith.mulf %116, %121 : vector<16x64xf32>
    %123 = arith.truncf %122 : vector<16x64xf32> to vector<16x64xbf16>
    %c0_46 = arith.constant 0 : index
    %c0_47 = arith.constant 0 : index
    %124 = vector.load %arg11[%c0_46, %c0_47] : memref<64x32xbf16, #tpu.memory_space<vmem>>, vector<64x32xbf16>
    %cst_48 = arith.constant dense<0.000000e+00> : vector<16x32xf32>
    %125 = tpu.matmul %123, %124, %cst_48 {dimension_numbers = #tpu.dot_dimension_numbers<[1], [0], [0], [1], [0, 0, 1, 1], [], []>} : vector<16x64xbf16>, vector<64x32xbf16>, vector<16x32xf32> -> vector<16x32xf32>
    %126 = arith.addf %84, %125 : vector<16x32xf32>
    %c0_49 = arith.constant 0 : index
    %c0_50 = arith.constant 0 : index
    %127 = vector.load %arg12[%c0_49, %c0_50] : memref<1x32xf32, #tpu.memory_space<vmem>>, vector<1x32xf32>
    %128 = vector.broadcast %127 : vector<1x32xf32> to vector<16x32xf32>
    %129 = arith.addf %126, %128 : vector<16x32xf32>
    %c0_51 = arith.constant 0 : index
    %c0_52 = arith.constant 0 : index
    %130 = vector.load %arg13[%c0_51, %c0_52] : memref<1x32xf32, #tpu.memory_space<vmem>>, vector<1x32xf32>
    %c0_53 = arith.constant 0 : index
    %c0_54 = arith.constant 0 : index
    %131 = vector.load %arg14[%c0_53, %c0_54] : memref<1x32xf32, #tpu.memory_space<vmem>>, vector<1x32xf32>
    %cst_55 = arith.constant dense<0.000000e+00> : vector<16xf32>
    %132 = vector.multi_reduction <add>, %129, %cst_55 [1] : vector<16x32xf32> to vector<16xf32>
    %133 = vector.shape_cast %132 : vector<16xf32> to vector<16x1xf32>
    %cst_56 = arith.constant 3.200000e+01 : f32
    %134 = vector.broadcast %cst_56 : f32 to vector<16x1xf32>
    %135 = arith.divf %133, %134 : vector<16x1xf32>
    %136 = vector.broadcast %135 : vector<16x1xf32> to vector<16x32xf32>
    %137 = arith.subf %129, %136 : vector<16x32xf32>
    %138 = arith.mulf %137, %137 : vector<16x32xf32>
    %cst_57 = arith.constant dense<0.000000e+00> : vector<16xf32>
    %139 = vector.multi_reduction <add>, %138, %cst_57 [1] : vector<16x32xf32> to vector<16xf32>
    %140 = vector.shape_cast %139 : vector<16xf32> to vector<16x1xf32>
    %cst_58 = arith.constant 3.200000e+01 : f32
    %141 = vector.broadcast %cst_58 : f32 to vector<16x1xf32>
    %142 = arith.divf %140, %141 : vector<16x1xf32>
    %143 = vector.broadcast %135 : vector<16x1xf32> to vector<16x32xf32>
    %144 = arith.subf %129, %143 : vector<16x32xf32>
    %cst_59 = arith.constant 9.99999974E-6 : f32
    %145 = vector.broadcast %cst_59 : f32 to vector<16x1xf32>
    %146 = arith.addf %142, %145 : vector<16x1xf32>
    %147 = math.rsqrt %146 : vector<16x1xf32>
    %148 = vector.broadcast %147 : vector<16x1xf32> to vector<16x32xf32>
    %149 = arith.mulf %144, %148 : vector<16x32xf32>
    %150 = vector.broadcast %130 : vector<1x32xf32> to vector<16x32xf32>
    %151 = arith.mulf %149, %150 : vector<16x32xf32>
    %152 = vector.broadcast %131 : vector<1x32xf32> to vector<16x32xf32>
    %153 = arith.addf %151, %152 : vector<16x32xf32>
    %154 = arith.truncf %153 : vector<16x32xf32> to vector<16x32xbf16>
    %c0_60 = arith.constant 0 : index
    %c0_61 = arith.constant 0 : index
    %155 = vector.load %arg15[%c0_60, %c0_61] : memref<32x96xbf16, #tpu.memory_space<vmem>>, vector<32x96xbf16>
    %cst_62 = arith.constant dense<0.000000e+00> : vector<16x96xf32>
    %156 = tpu.matmul %154, %155, %cst_62 {dimension_numbers = #tpu.dot_dimension_numbers<[1], [0], [0], [1], [0, 0, 1, 1], [], []>} : vector<16x32xbf16>, vector<32x96xbf16>, vector<16x96xf32> -> vector<16x96xf32>
    %157 = arith.truncf %156 : vector<16x96xf32> to vector<16x96xbf16>
    %158 = vector.extract_strided_slice %157 {offsets = [0, 0], sizes = [16, 8], strides = [1, 1]} : vector<16x96xbf16> to vector<16x8xbf16>
    %159 = vector.extract_strided_slice %157 {offsets = [0, 32], sizes = [16, 8], strides = [1, 1]} : vector<16x96xbf16> to vector<16x8xbf16>
    %cst_63 = arith.constant dense<0.000000e+00> : vector<16x16xf32>
    %160 = tpu.matmul %158, %159, %cst_63 {dimension_numbers = #tpu.dot_dimension_numbers<[1], [1], [0], [0], [0, 0, 1, 0], [], []>} : vector<16x8xbf16>, vector<16x8xbf16>, vector<16x16xf32> -> vector<16x16xf32>
    %161 = vector.extract_strided_slice %157 {offsets = [0, 8], sizes = [16, 8], strides = [1, 1]} : vector<16x96xbf16> to vector<16x8xbf16>
    %162 = vector.extract_strided_slice %157 {offsets = [0, 40], sizes = [16, 8], strides = [1, 1]} : vector<16x96xbf16> to vector<16x8xbf16>
    %cst_64 = arith.constant dense<0.000000e+00> : vector<16x16xf32>
    %163 = tpu.matmul %161, %162, %cst_64 {dimension_numbers = #tpu.dot_dimension_numbers<[1], [1], [0], [0], [0, 0, 1, 0], [], []>} : vector<16x8xbf16>, vector<16x8xbf16>, vector<16x16xf32> -> vector<16x16xf32>
    %164 = vector.extract_strided_slice %157 {offsets = [0, 16], sizes = [16, 8], strides = [1, 1]} : vector<16x96xbf16> to vector<16x8xbf16>
    %165 = vector.extract_strided_slice %157 {offsets = [0, 48], sizes = [16, 8], strides = [1, 1]} : vector<16x96xbf16> to vector<16x8xbf16>
    %cst_65 = arith.constant dense<0.000000e+00> : vector<16x16xf32>
    %166 = tpu.matmul %164, %165, %cst_65 {dimension_numbers = #tpu.dot_dimension_numbers<[1], [1], [0], [0], [0, 0, 1, 0], [], []>} : vector<16x8xbf16>, vector<16x8xbf16>, vector<16x16xf32> -> vector<16x16xf32>
    %167 = vector.extract_strided_slice %157 {offsets = [0, 24], sizes = [16, 8], strides = [1, 1]} : vector<16x96xbf16> to vector<16x8xbf16>
    %168 = vector.extract_strided_slice %157 {offsets = [0, 56], sizes = [16, 8], strides = [1, 1]} : vector<16x96xbf16> to vector<16x8xbf16>
    %cst_66 = arith.constant dense<0.000000e+00> : vector<16x16xf32>
    %169 = tpu.matmul %167, %168, %cst_66 {dimension_numbers = #tpu.dot_dimension_numbers<[1], [1], [0], [0], [0, 0, 1, 0], [], []>} : vector<16x8xbf16>, vector<16x8xbf16>, vector<16x16xf32> -> vector<16x16xf32>
    %170 = tpu.concatenate %160, %163, %166, %169 in 0 : vector<16x16xf32>, vector<16x16xf32>, vector<16x16xf32>, vector<16x16xf32> -> vector<64x16xf32>
    %171 = arith.addf %170, %1 : vector<64x16xf32>
    %cst_67 = arith.constant dense<0xFF800000> : vector<64xf32>
    %172 = vector.multi_reduction <maximumf>, %171, %cst_67 [1] : vector<64x16xf32> to vector<64xf32>
    %173 = vector.shape_cast %172 : vector<64xf32> to vector<64x1xf32>
    %174 = vector.broadcast %173 : vector<64x1xf32> to vector<64x16xf32>
    %175 = arith.subf %171, %174 : vector<64x16xf32>
    %176 = math.exp %175 : vector<64x16xf32>
    %cst_68 = arith.constant dense<0.000000e+00> : vector<64xf32>
    %177 = vector.multi_reduction <add>, %176, %cst_68 [1] : vector<64x16xf32> to vector<64xf32>
    %178 = vector.shape_cast %177 : vector<64xf32> to vector<64x1xf32>
    %179 = tpu.reciprocal %178 {approx = true} : vector<64x1xf32> -> vector<64x1xf32>
    %180 = arith.truncf %176 : vector<64x16xf32> to vector<64x16xbf16>
    %181 = vector.extract_strided_slice %157 {offsets = [0, 64], sizes = [16, 8], strides = [1, 1]} : vector<16x96xbf16> to vector<16x8xbf16>
    %182 = vector.extract_strided_slice %180 {offsets = [0, 0], sizes = [16, 16], strides = [1, 1]} : vector<64x16xbf16> to vector<16x16xbf16>
    %cst_69 = arith.constant dense<0.000000e+00> : vector<16x8xf32>
    %183 = tpu.matmul %182, %181, %cst_69 {dimension_numbers = #tpu.dot_dimension_numbers<[1], [0], [0], [1], [0, 0, 1, 1], [], []>} : vector<16x16xbf16>, vector<16x8xbf16>, vector<16x8xf32> -> vector<16x8xf32>
    %184 = vector.extract_strided_slice %179 {offsets = [0, 0], sizes = [16, 1], strides = [1, 1]} : vector<64x1xf32> to vector<16x1xf32>
    %185 = vector.broadcast %184 : vector<16x1xf32> to vector<16x8xf32>
    %186 = arith.mulf %183, %185 : vector<16x8xf32>
    %187 = vector.extract_strided_slice %157 {offsets = [0, 72], sizes = [16, 8], strides = [1, 1]} : vector<16x96xbf16> to vector<16x8xbf16>
    %188 = vector.extract_strided_slice %180 {offsets = [16, 0], sizes = [16, 16], strides = [1, 1]} : vector<64x16xbf16> to vector<16x16xbf16>
    %cst_70 = arith.constant dense<0.000000e+00> : vector<16x8xf32>
    %189 = tpu.matmul %188, %187, %cst_70 {dimension_numbers = #tpu.dot_dimension_numbers<[1], [0], [0], [1], [0, 0, 1, 1], [], []>} : vector<16x16xbf16>, vector<16x8xbf16>, vector<16x8xf32> -> vector<16x8xf32>
    %190 = vector.extract_strided_slice %179 {offsets = [16, 0], sizes = [16, 1], strides = [1, 1]} : vector<64x1xf32> to vector<16x1xf32>
    %191 = vector.broadcast %190 : vector<16x1xf32> to vector<16x8xf32>
    %192 = arith.mulf %189, %191 : vector<16x8xf32>
    %193 = vector.extract_strided_slice %157 {offsets = [0, 80], sizes = [16, 8], strides = [1, 1]} : vector<16x96xbf16> to vector<16x8xbf16>
    %194 = vector.extract_strided_slice %180 {offsets = [32, 0], sizes = [16, 16], strides = [1, 1]} : vector<64x16xbf16> to vector<16x16xbf16>
    %cst_71 = arith.constant dense<0.000000e+00> : vector<16x8xf32>
    %195 = tpu.matmul %194, %193, %cst_71 {dimension_numbers = #tpu.dot_dimension_numbers<[1], [0], [0], [1], [0, 0, 1, 1], [], []>} : vector<16x16xbf16>, vector<16x8xbf16>, vector<16x8xf32> -> vector<16x8xf32>
    %196 = vector.extract_strided_slice %179 {offsets = [32, 0], sizes = [16, 1], strides = [1, 1]} : vector<64x1xf32> to vector<16x1xf32>
    %197 = vector.broadcast %196 : vector<16x1xf32> to vector<16x8xf32>
    %198 = arith.mulf %195, %197 : vector<16x8xf32>
    %199 = vector.extract_strided_slice %157 {offsets = [0, 88], sizes = [16, 8], strides = [1, 1]} : vector<16x96xbf16> to vector<16x8xbf16>
    %200 = vector.extract_strided_slice %180 {offsets = [48, 0], sizes = [16, 16], strides = [1, 1]} : vector<64x16xbf16> to vector<16x16xbf16>
    %cst_72 = arith.constant dense<0.000000e+00> : vector<16x8xf32>
    %201 = tpu.matmul %200, %199, %cst_72 {dimension_numbers = #tpu.dot_dimension_numbers<[1], [0], [0], [1], [0, 0, 1, 1], [], []>} : vector<16x16xbf16>, vector<16x8xbf16>, vector<16x8xf32> -> vector<16x8xf32>
    %202 = vector.extract_strided_slice %179 {offsets = [48, 0], sizes = [16, 1], strides = [1, 1]} : vector<64x1xf32> to vector<16x1xf32>
    %203 = vector.broadcast %202 : vector<16x1xf32> to vector<16x8xf32>
    %204 = arith.mulf %201, %203 : vector<16x8xf32>
    %205 = tpu.concatenate %186, %192, %198, %204 in 1 : vector<16x8xf32>, vector<16x8xf32>, vector<16x8xf32>, vector<16x8xf32> -> vector<16x32xf32>
    %206 = arith.truncf %205 : vector<16x32xf32> to vector<16x32xbf16>
    %c0_73 = arith.constant 0 : index
    %c0_74 = arith.constant 0 : index
    %207 = vector.load %arg16[%c0_73, %c0_74] : memref<32x32xbf16, #tpu.memory_space<vmem>>, vector<32x32xbf16>
    %cst_75 = arith.constant dense<0.000000e+00> : vector<16x32xf32>
    %208 = tpu.matmul %206, %207, %cst_75 {dimension_numbers = #tpu.dot_dimension_numbers<[1], [0], [0], [1], [0, 0, 1, 1], [], []>} : vector<16x32xbf16>, vector<32x32xbf16>, vector<16x32xf32> -> vector<16x32xf32>
    %209 = arith.addf %129, %208 : vector<16x32xf32>
    %c0_76 = arith.constant 0 : index
    %c0_77 = arith.constant 0 : index
    %210 = vector.load %arg17[%c0_76, %c0_77] : memref<1x32xf32, #tpu.memory_space<vmem>>, vector<1x32xf32>
    %211 = vector.broadcast %210 : vector<1x32xf32> to vector<16x32xf32>
    %212 = arith.addf %209, %211 : vector<16x32xf32>
    %c0_78 = arith.constant 0 : index
    %c0_79 = arith.constant 0 : index
    %213 = vector.load %arg18[%c0_78, %c0_79] : memref<1x32xf32, #tpu.memory_space<vmem>>, vector<1x32xf32>
    %c0_80 = arith.constant 0 : index
    %c0_81 = arith.constant 0 : index
    %214 = vector.load %arg19[%c0_80, %c0_81] : memref<1x32xf32, #tpu.memory_space<vmem>>, vector<1x32xf32>
    %cst_82 = arith.constant dense<0.000000e+00> : vector<16xf32>
    %215 = vector.multi_reduction <add>, %212, %cst_82 [1] : vector<16x32xf32> to vector<16xf32>
    %216 = vector.shape_cast %215 : vector<16xf32> to vector<16x1xf32>
    %cst_83 = arith.constant 3.200000e+01 : f32
    %217 = vector.broadcast %cst_83 : f32 to vector<16x1xf32>
    %218 = arith.divf %216, %217 : vector<16x1xf32>
    %219 = vector.broadcast %218 : vector<16x1xf32> to vector<16x32xf32>
    %220 = arith.subf %212, %219 : vector<16x32xf32>
    %221 = arith.mulf %220, %220 : vector<16x32xf32>
    %cst_84 = arith.constant dense<0.000000e+00> : vector<16xf32>
    %222 = vector.multi_reduction <add>, %221, %cst_84 [1] : vector<16x32xf32> to vector<16xf32>
    %223 = vector.shape_cast %222 : vector<16xf32> to vector<16x1xf32>
    %cst_85 = arith.constant 3.200000e+01 : f32
    %224 = vector.broadcast %cst_85 : f32 to vector<16x1xf32>
    %225 = arith.divf %223, %224 : vector<16x1xf32>
    %226 = vector.broadcast %218 : vector<16x1xf32> to vector<16x32xf32>
    %227 = arith.subf %212, %226 : vector<16x32xf32>
    %cst_86 = arith.constant 9.99999974E-6 : f32
    %228 = vector.broadcast %cst_86 : f32 to vector<16x1xf32>
    %229 = arith.addf %225, %228 : vector<16x1xf32>
    %230 = math.rsqrt %229 : vector<16x1xf32>
    %231 = vector.broadcast %230 : vector<16x1xf32> to vector<16x32xf32>
    %232 = arith.mulf %227, %231 : vector<16x32xf32>
    %233 = vector.broadcast %213 : vector<1x32xf32> to vector<16x32xf32>
    %234 = arith.mulf %232, %233 : vector<16x32xf32>
    %235 = vector.broadcast %214 : vector<1x32xf32> to vector<16x32xf32>
    %236 = arith.addf %234, %235 : vector<16x32xf32>
    %237 = arith.truncf %236 : vector<16x32xf32> to vector<16x32xbf16>
    %c0_87 = arith.constant 0 : index
    %c0_88 = arith.constant 0 : index
    %238 = vector.load %arg20[%c0_87, %c0_88] : memref<32x64xbf16, #tpu.memory_space<vmem>>, vector<32x64xbf16>
    %cst_89 = arith.constant dense<0.000000e+00> : vector<16x64xf32>
    %239 = tpu.matmul %237, %238, %cst_89 {dimension_numbers = #tpu.dot_dimension_numbers<[1], [0], [0], [1], [0, 0, 1, 1], [], []>} : vector<16x32xbf16>, vector<32x64xbf16>, vector<16x64xf32> -> vector<16x64xf32>
    %c0_90 = arith.constant 0 : index
    %c0_91 = arith.constant 0 : index
    %240 = vector.load %arg21[%c0_90, %c0_91] : memref<1x64xf32, #tpu.memory_space<vmem>>, vector<1x64xf32>
    %241 = vector.broadcast %240 : vector<1x64xf32> to vector<16x64xf32>
    %242 = arith.addf %239, %241 : vector<16x64xf32>
    %cst_92 = arith.constant 5.000000e-01 : f32
    %243 = vector.broadcast %cst_92 : f32 to vector<16x64xf32>
    %244 = arith.mulf %243, %242 : vector<16x64xf32>
    %cst_93 = arith.constant 0.707106769 : f32
    %245 = vector.broadcast %cst_93 : f32 to vector<16x64xf32>
    %246 = arith.mulf %242, %245 : vector<16x64xf32>
    %247 = math.erf %246 : vector<16x64xf32>
    %cst_94 = arith.constant 1.000000e+00 : f32
    %248 = vector.broadcast %cst_94 : f32 to vector<16x64xf32>
    %249 = arith.addf %248, %247 : vector<16x64xf32>
    %250 = arith.mulf %244, %249 : vector<16x64xf32>
    %251 = arith.truncf %250 : vector<16x64xf32> to vector<16x64xbf16>
    %c0_95 = arith.constant 0 : index
    %c0_96 = arith.constant 0 : index
    %252 = vector.load %arg22[%c0_95, %c0_96] : memref<64x32xbf16, #tpu.memory_space<vmem>>, vector<64x32xbf16>
    %cst_97 = arith.constant dense<0.000000e+00> : vector<16x32xf32>
    %253 = tpu.matmul %251, %252, %cst_97 {dimension_numbers = #tpu.dot_dimension_numbers<[1], [0], [0], [1], [0, 0, 1, 1], [], []>} : vector<16x64xbf16>, vector<64x32xbf16>, vector<16x32xf32> -> vector<16x32xf32>
    %254 = arith.addf %212, %253 : vector<16x32xf32>
    %c0_98 = arith.constant 0 : index
    %c0_99 = arith.constant 0 : index
    %255 = vector.load %arg23[%c0_98, %c0_99] : memref<1x32xf32, #tpu.memory_space<vmem>>, vector<1x32xf32>
    %256 = vector.broadcast %255 : vector<1x32xf32> to vector<16x32xf32>
    %257 = arith.addf %254, %256 : vector<16x32xf32>
    %c0_100 = arith.constant 0 : index
    %c0_101 = arith.constant 0 : index
    %258 = vector.load %arg24[%c0_100, %c0_101] : memref<16x32xf32, #tpu.memory_space<vmem>>, vector<16x32xf32>
    tpu.vector_store %arg24[%c0_100, %c0_101], %257 {strides = array<i32>} : memref<16x32xf32, #tpu.memory_space<vmem>>, vector<16x32xf32>,
    return
  }
}

</mosaic_0001>

<llo_original>
// kernel: transformer_forward.1
$region0: #{transformer_forward.1}
  #allocation0 [shape = 'u32[]', space=smem, size = 0x4, offset = 0x4, fixed_abs, tag = 'smem constant byte address 0x4 - core index']
  #allocation1 [shape = 'u32[144,128]{1,0:T(1,128)}', space=vmem, size = 0x12000, scoped, tag = 'internal scratch']
  %s0 = inlined_call_operand.vmem [shape: f32[16,32], index: 0, kind: input, shape index: {}]
  %s1 = inlined_call_operand.vmem [shape: f32[64,16], index: 1, kind: input, shape index: {}]
  %s2 = inlined_call_operand.hbm [shape: f32[1,32], index: 2, kind: input, shape index: {}]
  %s3 = inlined_call_operand.hbm [shape: f32[1,32], index: 3, kind: input, shape index: {}]
  %s4 = inlined_call_operand.vmem [shape: bf16[32,96], index: 4, kind: input, shape index: {}]
  %s5 = inlined_call_operand.hbm [shape: bf16[32,32], index: 5, kind: input, shape index: {}]
  %s6 = inlined_call_operand.hbm [shape: f32[1,32], index: 6, kind: input, shape index: {}]
  %s7 = inlined_call_operand.hbm [shape: f32[1,32], index: 7, kind: input, shape index: {}]
  %s8 = inlined_call_operand.hbm [shape: f32[1,32], index: 8, kind: input, shape index: {}]
  %s9 = inlined_call_operand.hbm [shape: bf16[32,64], index: 9, kind: input, shape index: {}]
  %s10 = inlined_call_operand.hbm [shape: f32[1,64], index: 10, kind: input, shape index: {}]
  %s11 = inlined_call_operand.vmem [shape: bf16[64,32], index: 11, kind: input, shape index: {}]
  %s12 = inlined_call_operand.hbm [shape: f32[1,32], index: 12, kind: input, shape index: {}]
  %s13 = inlined_call_operand.hbm [shape: f32[1,32], index: 13, kind: input, shape index: {}]
  %s14 = inlined_call_operand.hbm [shape: f32[1,32], index: 14, kind: input, shape index: {}]
  %s15 = inlined_call_operand.vmem [shape: bf16[32,96], index: 15, kind: input, shape index: {}]
  %s16 = inlined_call_operand.hbm [shape: bf16[32,32], index: 16, kind: input, shape index: {}]
  %s17 = inlined_call_operand.hbm [shape: f32[1,32], index: 17, kind: input, shape index: {}]
  %s18 = inlined_call_operand.vmem [shape: f32[1,32], index: 18, kind: input, shape index: {}]
  %s19 = inlined_call_operand.vmem [shape: f32[1,32], index: 19, kind: input, shape index: {}]
  %s20 = inlined_call_operand.vmem [shape: bf16[32,64], index: 20, kind: input, shape index: {}]
  %s21 = inlined_call_operand.vmem [shape: f32[1,64], index: 21, kind: input, shape index: {}]
  %s22 = inlined_call_operand.vmem [shape: bf16[64,32], index: 22, kind: input, shape index: {}]
  %s23 = inlined_call_operand.vmem [shape: f32[1,32], index: 23, kind: input, shape index: {}]
  %s24 = inlined_call_operand.hbm [shape: f32[16,32], index: 24, kind: output, shape index: {}]
  %s25 = sld [smem:[#allocation0]]
  $region158: #{transformer_forward.1} parent=0
    _
  %s27 = ssub.s32 1, %s25
  %s28 = scalar_select 0, %s27, %s25
  $region1: #{transformer_forward.1} parent=0
    #allocation2 [shape = 'u8[512]{0}', space=vmem, size = 0x400, scoped, tag = 'input window, operand 2, single buffered']
    #allocation3 [shape = 's32[1]{0}', space=sflag, size = 0x4, scoped, tag = 'scoped memory for transformer_forward.1']
    #allocation4 [shape = 's32[1]{0}', space=sflag, size = 0x4, scoped, tag = 'scoped memory for transformer_forward.1']
    #allocation5 [shape = 'u8[512]{0}', space=vmem, size = 0x400, scoped, tag = 'input window, operand 3, single buffered']
    #allocation6 [shape = 's32[1]{0}', space=sflag, size = 0x4, scoped, tag = 'scoped memory for transformer_forward.1']
    #allocation7 [shape = 'u8[8192]{0}', space=vmem, size = 0x2000, scoped, tag = 'input window, operand 5, single buffered']
    #allocation8 [shape = 'u8[512]{0}', space=vmem, size = 0x400, scoped, tag = 'input window, operand 6, single buffered']
    #allocation9 [shape = 's32[1]{0}', space=sflag, size = 0x4, scoped, tag = 'scoped memory for transformer_forward.1']
    #allocation10 [shape = 'u8[512]{0}', space=vmem, size = 0x400, scoped, tag = 'input window, operand 7, single buffered']
    #allocation11 [shape = 'u8[512]{0}', space=vmem, size = 0x400, scoped, tag = 'input window, operand 8, single buffered']
    #allocation12 [shape = 's32[1]{0}', space=sflag, size = 0x4, scoped, tag = 'scoped memory for transformer_forward.1']
    #allocation13 [shape = 'u8[8192]{0}', space=vmem, size = 0x2000, scoped, tag = 'input window, operand 9, single buffered']
    #allocation14 [shape = 'u8[512]{0}', space=vmem, size = 0x400, scoped, tag = 'input window, operand 10, single buffered']
    #allocation15 [shape = 's32[1]{0}', space=sflag, size = 0x4, scoped, tag = 'scoped memory for transformer_forward.1']
    #allocation16 [shape = 'u8[512]{0}', space=vmem, size = 0x400, scoped, tag = 'input window, operand 12, single buffered']
    #allocation17 [shape = 'u8[512]{0}', space=vmem, size = 0x400, scoped, tag = 'input window, operand 13, single buffered']
    #allocation18 [shape = 's32[1]{0}', space=sflag, size = 0x4, scoped, tag = 'scoped memory for transformer_forward.1']
    #allocation19 [shape = 'u8[512]{0}', space=vmem, size = 0x400, scoped, tag = 'input window, operand 14, single buffered']
    #allocation20 [shape = 'u8[8192]{0}', space=vmem, size = 0x2000, scoped, tag = 'input window, operand 16, single buffered']
    #allocation21 [shape = 's32[1]{0}', space=sflag, size = 0x4, scoped, tag = 'scoped memory for transformer_forward.1']
    #allocation22 [shape = 'u8[512]{0}', space=vmem, size = 0x400, scoped, tag = 'input window, operand 17, single buffered']
    #allocation23 [shape = 'u8[8192]{0}', space=vmem, size = 0x2000, scoped, tag = 'output window, operand 0, single buffered']
    %29 = vsyncpa [#allocation3], 0
    %30 = vsyncpa [#allocation6], 0
    %31 = vsyncpa [#allocation9], 0
    %32 = vsyncpa [#allocation12], 0
    %33 = vsyncpa [#allocation15], 0
    %34 = vsyncpa [#allocation18], 0
    %35 = vsyncpa [#allocation21], 0
    %36 = vsyncpa [#allocation4], 0
    // Predicated region
    $region2: #{transformer_forward.1} parent=1 // pred_check
      _
    $region3: #{transformer_forward.1} parent=1 // pred_check_branch
      %38 = sbr.rel (0) target = $region5
    $region4: #{transformer_forward.1} parent=1 // pred_region
      _
    $region5: #{transformer_forward.1} parent=1 // pred_fallthru
      _
    // Predicated region
    $region6: #{transformer_forward.1} parent=1 // pred_check
      _
    $region7: #{transformer_forward.1} parent=1 // pred_check_branch
      %40 = sbr.rel (0) target = $region9
    $region8: #{transformer_forward.1} parent=1 // pred_region
      _
    $region9: #{transformer_forward.1} parent=1 // pred_fallthru
      _
    // Predicated region
    $region10: #{transformer_forward.1} parent=1 // pred_check
      _
    $region11: #{transformer_forward.1} parent=1 // pred_check_branch
      %42 = sbr.rel (0) target = $region13
    $region12: #{transformer_forward.1} parent=1 // pred_region
      %s44 = ssub.s32 16, 16
      %45 = vsyncadd [#allocation3], %s44
      %s47 = sshll.u32 [#allocation2], 4
      %s48 = int_to_ptr.vmem [resolvable:$true] %s47
      %50 = dma.hbm_to_vmem [thread:$0]  %s2, 16, %s48, [#allocation3]
    $region13: #{transformer_forward.1} parent=1 // pred_fallthru
      _
    // Predicated region
    $region14: #{transformer_forward.1} parent=1 // pred_check
      _
    $region15: #{transformer_forward.1} parent=1 // pred_check_branch
      %52 = sbr.rel (0) target = $region17
    $region16: #{transformer_forward.1} parent=1 // pred_region
      %s54 = ssub.s32 16, 16
      %55 = vsyncadd [#allocation6], %s54
      %s57 = sshll.u32 [#allocation5], 4
      %s58 = int_to_ptr.vmem [resolvable:$true] %s57
      %60 = dma.hbm_to_vmem [thread:$0]  %s3, 16, %s58, [#allocation6]
    $region17: #{transformer_forward.1} parent=1 // pred_fallthru
      _
    // Predicated region
    $region18: #{transformer_forward.1} parent=1 // pred_check
      _
    $region19: #{transformer_forward.1} parent=1 // pred_check_branch
      %62 = sbr.rel (0) target = $region21
    $region20: #{transformer_forward.1} parent=1 // pred_region
      _
    $region21: #{transformer_forward.1} parent=1 // pred_fallthru
      _
    // Predicated region
    $region22: #{transformer_forward.1} parent=1 // pred_check
      _
    $region23: #{transformer_forward.1} parent=1 // pred_check_branch
      %64 = sbr.rel (0) target = $region25
    $region24: #{transformer_forward.1} parent=1 // pred_region
      %s66 = ssub.s32 256, 256
      %67 = vsyncadd [#allocation6], %s66
      %s68 = sshll.u32 [#allocation7], 4
      %s69 = int_to_ptr.vmem [resolvable:$true] %s68
      %74 = dma.hbm_to_vmem [thread:$0]  %s5, 256, %s69, [#allocation6], 64, 64, 4
    $region25: #{transformer_forward.1} parent=1 // pred_fallthru
      _
    // Predicated region
    $region26: #{transformer_forward.1} parent=1 // pred_check
      _
    $region27: #{transformer_forward.1} parent=1 // pred_check_branch
      %76 = sbr.rel (0) target = $region29
    $region28: #{transformer_forward.1} parent=1 // pred_region
      %s78 = ssub.s32 16, 16
      %79 = vsyncadd [#allocation9], %s78
      %s81 = sshll.u32 [#allocation8], 4
      %s82 = int_to_ptr.vmem [resolvable:$true] %s81
      %84 = dma.hbm_to_vmem [thread:$0]  %s6, 16, %s82, [#allocation9]
    $region29: #{transformer_forward.1} parent=1 // pred_fallthru
      _
    // Predicated region
    $region30: #{transformer_forward.1} parent=1 // pred_check
      _
    $region31: #{transformer_forward.1} parent=1 // pred_check_branch
      %86 = sbr.rel (0) target = $region33
    $region32: #{transformer_forward.1} parent=1 // pred_region
      %s88 = ssub.s32 16, 16
      %89 = vsyncadd [#allocation9], %s88
      %s91 = sshll.u32 [#allocation10], 4
      %s92 = int_to_ptr.vmem [resolvable:$true] %s91
      %94 = dma.hbm_to_vmem [thread:$0]  %s7, 16, %s92, [#allocation9]
    $region33: #{transformer_forward.1} parent=1 // pred_fallthru
      _
    // Predicated region
    $region34: #{transformer_forward.1} parent=1 // pred_check
      _
    $region35: #{transformer_forward.1} parent=1 // pred_check_branch
      %96 = sbr.rel (0) target = $region37
    $region36: #{transformer_forward.1} parent=1 // pred_region
      %s98 = ssub.s32 16, 16
      %99 = vsyncadd [#allocation12], %s98
      %s101 = sshll.u32 [#allocation11], 4
      %s102 = int_to_ptr.vmem [resolvable:$true] %s101
      %104 = dma.hbm_to_vmem [thread:$0]  %s8, 16, %s102, [#allocation12]
    $region37: #{transformer_forward.1} parent=1 // pred_fallthru
      _
    // Predicated region
    $region38: #{transformer_forward.1} parent=1 // pred_check
      _
    $region39: #{transformer_forward.1} parent=1 // pred_check_branch
      %106 = sbr.rel (0) target = $region41
    $region40: #{transformer_forward.1} parent=1 // pred_region
      %s108 = ssub.s32 256, 256
      %109 = vsyncadd [#allocation12], %s108
      %s110 = sshll.u32 [#allocation13], 4
      %s111 = int_to_ptr.vmem [resolvable:$true] %s110
      %116 = dma.hbm_to_vmem [thread:$0]  %s9, 256, %s111, [#allocation12], 64, 64, 4
    $region41: #{transformer_forward.1} parent=1 // pred_fallthru
      _
    // Predicated region
    $region42: #{transformer_forward.1} parent=1 // pred_check
      _
    $region43: #{transformer_forward.1} parent=1 // pred_check_branch
      %118 = sbr.rel (0) target = $region45
    $region44: #{transformer_forward.1} parent=1 // pred_region
      %s120 = ssub.s32 16, 16
      %121 = vsyncadd [#allocation15], %s120
      %s123 = sshll.u32 [#allocation14], 4
      %s124 = int_to_ptr.vmem [resolvable:$true] %s123
      %126 = dma.hbm_to_vmem [thread:$0]  %s10, 16, %s124, [#allocation15]
    $region45: #{transformer_forward.1} parent=1 // pred_fallthru
      _
    // Predicated region
    $region46: #{transformer_forward.1} parent=1 // pred_check
      _
    $region47: #{transformer_forward.1} parent=1 // pred_check_branch
      %128 = sbr.rel (0) target = $region49
    $region48: #{transformer_forward.1} parent=1 // pred_region
      _
    $region49: #{transformer_forward.1} parent=1 // pred_fallthru
      _
    // Predicated region
    $region50: #{transformer_forward.1} parent=1 // pred_check
      _
    $region51: #{transformer_forward.1} parent=1 // pred_check_branch
      %130 = sbr.rel (0) target = $region53
    $region52: #{transformer_forward.1} parent=1 // pred_region
      %s132 = ssub.s32 16, 16
      %133 = vsyncadd [#allocation15], %s132
      %s135 = sshll.u32 [#allocation16], 4
      %s136 = int_to_ptr.vmem [resolvable:$true] %s135
      %138 = dma.hbm_to_vmem [thread:$0]  %s12, 16, %s136, [#allocation15]
    $region53: #{transformer_forward.1} parent=1 // pred_fallthru
      _
    // Predicated region
    $region54: #{transformer_forward.1} parent=1 // pred_check
      _
    $region55: #{transformer_forward.1} parent=1 // pred_check_branch
      %140 = sbr.rel (0) target = $region57
    $region56: #{transformer_forward.1} parent=1 // pred_region
      %s142 = ssub.s32 16, 16
      %143 = vsyncadd [#allocation18], %s142
      %s145 = sshll.u32 [#allocation17], 4
      %s146 = int_to_ptr.vmem [resolvable:$true] %s145
      %148 = dma.hbm_to_vmem [thread:$0]  %s13, 16, %s146, [#allocation18]
    $region57: #{transformer_forward.1} parent=1 // pred_fallthru
      _
    // Predicated region
    $region58: #{transformer_forward.1} parent=1 // pred_check
      _
    $region59: #{transformer_forward.1} parent=1 // pred_check_branch
      %150 = sbr.rel (0) target = $region61
    $region60: #{transformer_forward.1} parent=1 // pred_region
      %s152 = ssub.s32 16, 16
      %153 = vsyncadd [#allocation18], %s152
      %s155 = sshll.u32 [#allocation19], 4
      %s156 = int_to_ptr.vmem [resolvable:$true] %s155
      %158 = dma.hbm_to_vmem [thread:$0]  %s14, 16, %s156, [#allocation18]
    $region61: #{transformer_forward.1} parent=1 // pred_fallthru
      _
    // Predicated region
    $region62: #{transformer_forward.1} parent=1 // pred_check
      _
    $region63: #{transformer_forward.1} parent=1 // pred_check_branch
      %160 = sbr.rel (0) target = $region65
    $region64: #{transformer_forward.1} parent=1 // pred_region
      _
    $region65: #{transformer_forward.1} parent=1 // pred_fallthru
      _
    // Predicated region
    $region66: #{transformer_forward.1} parent=1 // pred_check
      _
    $region67: #{transformer_forward.1} parent=1 // pred_check_branch
      %162 = sbr.rel (0) target = $region69
    $region68: #{transformer_forward.1} parent=1 // pred_region
      %s164 = ssub.s32 256, 256
      %165 = vsyncadd [#allocation21], %s164
      %s166 = sshll.u32 [#allocation20], 4
      %s167 = int_to_ptr.vmem [resolvable:$true] %s166
      %172 = dma.hbm_to_vmem [thread:$0]  %s16, 256, %s167, [#allocation21], 64, 64, 4
    $region69: #{transformer_forward.1} parent=1 // pred_fallthru
      _
    // Predicated region
    $region70: #{transformer_forward.1} parent=1 // pred_check
      _
    $region71: #{transformer_forward.1} parent=1 // pred_check_branch
      %174 = sbr.rel (0) target = $region73
    $region72: #{transformer_forward.1} parent=1 // pred_region
      %s176 = ssub.s32 16, 16
      %177 = vsyncadd [#allocation21], %s176
      %s179 = sshll.u32 [#allocation22], 4
      %s180 = int_to_ptr.vmem [resolvable:$true] %s179
      %182 = dma.hbm_to_vmem [thread:$0]  %s17, 16, %s180, [#allocation21]
    $region73: #{transformer_forward.1} parent=1 // pred_fallthru
      _
    // Predicated region
    $region74: #{transformer_forward.1} parent=1 // pred_check
      _
    $region75: #{transformer_forward.1} parent=1 // pred_check_branch
      %184 = sbr.rel (0) target = $region77
    $region76: #{transformer_forward.1} parent=1 // pred_region
      _
    $region77: #{transformer_forward.1} parent=1 // pred_fallthru
      _
    // Predicated region
    $region78: #{transformer_forward.1} parent=1 // pred_check
      _
    $region79: #{transformer_forward.1} parent=1 // pred_check_branch
      %186 = sbr.rel (0) target = $region81
    $region80: #{transformer_forward.1} parent=1 // pred_region
      _
    $region81: #{transformer_forward.1} parent=1 // pred_fallthru
      _
    // Predicated region
    $region82: #{transformer_forward.1} parent=1 // pred_check
      _
    $region83: #{transformer_forward.1} parent=1 // pred_check_branch
      %188 = sbr.rel (0) target = $region85
    $region84: #{transformer_forward.1} parent=1 // pred_region
      _
    $region85: #{transformer_forward.1} parent=1 // pred_fallthru
      _
    // Predicated region
    $region86: #{transformer_forward.1} parent=1 // pred_check
      _
    $region87: #{transformer_forward.1} parent=1 // pred_check_branch
      %190 = sbr.rel (0) target = $region89
    $region88: #{transformer_forward.1} parent=1 // pred_region
      _
    $region89: #{transformer_forward.1} parent=1 // pred_fallthru
      _
    // Predicated region
    $region90: #{transformer_forward.1} parent=1 // pred_check
      _
    $region91: #{transformer_forward.1} parent=1 // pred_check_branch
      %192 = sbr.rel (0) target = $region93
    $region92: #{transformer_forward.1} parent=1 // pred_region
      _
    $region93: #{transformer_forward.1} parent=1 // pred_fallthru
      _
    // Predicated region
    $region94: #{transformer_forward.1} parent=1 // pred_check
      _
    $region95: #{transformer_forward.1} parent=1 // pred_check_branch
      %194 = sbr.rel (0) target = $region97
    $region96: #{transformer_forward.1} parent=1 // pred_region
      _
    $region97: #{transformer_forward.1} parent=1 // pred_fallthru
      _
    // Predicated region
    $region98: #{transformer_forward.1} parent=1 // pred_check
      _
    $region99: #{transformer_forward.1} parent=1 // pred_check_branch
      %196 = sbr.rel (0) target = $region101
    $region100: #{transformer_forward.1} parent=1 // pred_region
      %197 = dma.done [#allocation3], 16
    $region101: #{transformer_forward.1} parent=1 // pred_fallthru
      _
    // Predicated region
    $region102: #{transformer_forward.1} parent=1 // pred_check
      _
    $region103: #{transformer_forward.1} parent=1 // pred_check_branch
      %199 = sbr.rel (0) target = $region105
    $region104: #{transformer_forward.1} parent=1 // pred_region
      %200 = dma.done [#allocation6], 16
    $region105: #{transformer_forward.1} parent=1 // pred_fallthru
      _
    // Predicated region
    $region106: #{transformer_forward.1} parent=1 // pred_check
      _
    $region107: #{transformer_forward.1} parent=1 // pred_check_branch
      %202 = sbr.rel (0) target = $region109
    $region108: #{transformer_forward.1} parent=1 // pred_region
      %203 = dma.done [#allocation6], 256
    $region109: #{transformer_forward.1} parent=1 // pred_fallthru
      _
    // Predicated region
    $region110: #{transformer_forward.1} parent=1 // pred_check
      _
    $region111: #{transformer_forward.1} parent=1 // pred_check_branch
      %205 = sbr.rel (0) target = $region113
    $region112: #{transformer_forward.1} parent=1 // pred_region
      %206 = dma.done [#allocation9], 16
    $region113: #{transformer_forward.1} parent=1 // pred_fallthru
      _
    // Predicated region
    $region114: #{transformer_forward.1} parent=1 // pred_check
      _
    $region115: #{transformer_forward.1} parent=1 // pred_check_branch
      %208 = sbr.rel (0) target = $region117
    $region116: #{transformer_forward.1} parent=1 // pred_region
      %209 = dma.done [#allocation9], 16
    $region117: #{transformer_forward.1} parent=1 // pred_fallthru
      _
    // Predicated region
    $region118: #{transformer_forward.1} parent=1 // pred_check
      _
    $region119: #{transformer_forward.1} parent=1 // pred_check_branch
      %211 = sbr.rel (0) target = $region121
    $region120: #{transformer_forward.1} parent=1 // pred_region
      %212 = dma.done [#allocation12], 16
    $region121: #{transformer_forward.1} parent=1 // pred_fallthru
      _
    // Predicated region
    $region122: #{transformer_forward.1} parent=1 // pred_check
      _
    $region123: #{transformer_forward.1} parent=1 // pred_check_branch
      %214 = sbr.rel (0) target = $region125
    $region124: #{transformer_forward.1} parent=1 // pred_region
      %215 = dma.done [#allocation12], 256
    $region125: #{transformer_forward.1} parent=1 // pred_fallthru
      _
    // Predicated region
    $region126: #{transformer_forward.1} parent=1 // pred_check
      _
    $region127: #{transformer_forward.1} parent=1 // pred_check_branch
      %217 = sbr.rel (0) target = $region129
    $region128: #{transformer_forward.1} parent=1 // pred_region
      %218 = dma.done [#allocation15], 16
    $region129: #{transformer_forward.1} parent=1 // pred_fallthru
      _
    // Predicated region
    $region130: #{transformer_forward.1} parent=1 // pred_check
      _
    $region131: #{transformer_forward.1} parent=1 // pred_check_branch
      %220 = sbr.rel (0) target = $region133
    $region132: #{transformer_forward.1} parent=1 // pred_region
      %221 = dma.done [#allocation15], 16
    $region133: #{transformer_forward.1} parent=1 // pred_fallthru
      _
    // Predicated region
    $region134: #{transformer_forward.1} parent=1 // pred_check
      _
    $region135: #{transformer_forward.1} parent=1 // pred_check_branch
      %223 = sbr.rel (0) target = $region137
    $region136: #{transformer_forward.1} parent=1 // pred_region
      %224 = dma.done [#allocation18], 16
    $region137: #{transformer_forward.1} parent=1 // pred_fallthru
      _
    // Predicated region
    $region138: #{transformer_forward.1} parent=1 // pred_check
      _
    $region139: #{transformer_forward.1} parent=1 // pred_check_branch
      %226 = sbr.rel (0) target = $region141
    $region140: #{transformer_forward.1} parent=1 // pred_region
      %227 = dma.done [#allocation18], 16
    $region141: #{transformer_forward.1} parent=1 // pred_fallthru
      _
    // Predicated region
    $region142: #{transformer_forward.1} parent=1 // pred_check
      _
    $region143: #{transformer_forward.1} parent=1 // pred_check_branch
      %229 = sbr.rel (0) target = $region145
    $region144: #{transformer_forward.1} parent=1 // pred_region
      %230 = dma.done [#allocation21], 256
    $region145: #{transformer_forward.1} parent=1 // pred_fallthru
      _
    // Predicated region
    $region146: #{transformer_forward.1} parent=1 // pred_check
      _
    $region147: #{transformer_forward.1} parent=1 // pred_check_branch
      %232 = sbr.rel (0) target = $region149
    $region148: #{transformer_forward.1} parent=1 // pred_region
      %233 = dma.done [#allocation21], 16
    $region149: #{transformer_forward.1} parent=1 // pred_fallthru
      _
    %v235 = vld [vmem:[%s0] sm:$0xff]
    %v236 = vld [vmem:[%s0 + $0x8] sm:$0xff]
    %v237 = vld [vmem:[%s1] sm:$0xff]
    %v238 = vld [vmem:[%s1 + $0x8] sm:$0xff]
    %v239 = vld [vmem:[%s1 + $0x10] sm:$0xff]
    %v240 = vld [vmem:[%s1 + $0x18] sm:$0xff]
    %v241 = vld [vmem:[%s1 + $0x20] sm:$0xff]
    %v242 = vld [vmem:[%s1 + $0x28] sm:$0xff]
    %v243 = vld [vmem:[%s1 + $0x30] sm:$0xff]
    %v244 = vld [vmem:[%s1 + $0x38] sm:$0xff]
    %v245 = vld [vmem:[#allocation2] sm:$0x1]
    %v246 = vld [vmem:[#allocation5] sm:$0x1]
    %vm247 = vcmask 261120
    %v248 = vsel %vm247, %v235, 0.0
    %249 = vadd.xlane.f32.xlu0 %v248
    %v250 = vpop.xlane.xlu0 %249
    %v251 = vsel %vm247, %v236, 0.0
    %252 = vadd.xlane.f32.xlu0 %v251
    %v253 = vpop.xlane.xlu0 %252
    %v254 = vrcp.pop 32.0
    %v255 = vmul.f32 %v250, %v254
    %v256 = vmul.f32 %v253, %v254
    %v257 = vsub.f32 %v235, %v255
    %v258 = vsub.f32 %v236, %v256
    %v259 = vmul.f32 %v257, %v257
    %v260 = vmul.f32 %v258, %v258
    %v261 = vsel %vm247, %v259, 0.0
    %262 = vadd.xlane.f32.xlu0 %v261
    %v263 = vpop.xlane.xlu0 %262
    %v264 = vsel %vm247, %v260, 0.0
    %265 = vadd.xlane.f32.xlu0 %v264
    %v266 = vpop.xlane.xlu0 %265
    %v267 = vmul.f32 %v263, %v254
    %v268 = vmul.f32 %v266, %v254
    %v269 = vadd.f32 %v267, 1e-05
    %v270 = vadd.f32 %v268, 1e-05
    %v271 = vrsqrt.pop %v269
    %v272 = vrsqrt.pop %v270
    %v273 = vmul.f32 %v257, %v271
    %v274 = vmul.f32 %v258, %v272
    %v276 = vlaneseq
    %v277 = vshrl.u32 %v276, 7
    %v278 = vsub.s32 0, %v277
    %v279 = vrot.slane %v245, %v278
    %v281 = vmul.f32 %v273, %v279
    %v282 = vmul.f32 %v274, %v279
    %v284 = vlaneseq
    %v285 = vshrl.u32 %v284, 7
    %v286 = vsub.s32 0, %v285
    %v287 = vrot.slane %v246, %v286
    %v289 = vadd.f32 %v281, %v287
    %v290 = vadd.f32 %v282, %v287
    %v291 = vpack.c.bf16 %v290, %v289
    %v292 = vld [vmem:[%s4] sm:$0xf]
    %v293 = vld [vmem:[%s4 + $0x4] sm:$0xf]
    %v294 = vld [vmem:[%s4 + $0x8] sm:$0xf]
    %v295 = vld [vmem:[%s4 + $0xc] sm:$0xf]
    %v300 = vunpack.c.l.b16 %v292
    %v301 = vunpack.c.l.b16 %v293
    %v302 = vunpack.c.l.b16 %v294
    %v303 = vunpack.c.l.b16 %v295
    %v304 = vpack.c.b16 %v301, %v300
    %v305 = vpack.c.b16 %v303, %v302
    %v309 = vsel %vm247, %v291, 0
    %311 = vmatprep.subr.bf16.mxu0 0
    %312 = vmatpush1.bf16.msra.mxu0 %v304
    %313 = vmatprep.subr.bf16.mxu0 0
    %314 = vmatpush1.bf16.msra.mxu0 %v305
    %315 = vmatprep.subr.bf16.mxu0 0
    %316 = vmatpush1.bf16.msra.mxu0 0
    %317 = vmatprep.subr.bf16.mxu0 0
    %318 = vmatpush1.bf16.msra.mxu0 0
    %319 = vmatprep.subr.bf16.mxu0 0
    %320 = vmatpush1.bf16.msra.mxu0 0
    %321 = vmatprep.subr.bf16.mxu0 0
    %322 = vmatpush1.bf16.msra.mxu0 0
    %323 = vmatprep.subr.bf16.mxu0 0
    %324 = vmatpush1.bf16.msra.mxu0 0
    %325 = vmatprep.subr.bf16.mxu0 0
    %326 = vmatpush1.bf16.msra.mxu0 0
    %327 = vmatprep.subr.bf16.mxu0 0
    %328 = vmatpush1.bf16.msra.mxu0 0
    %329 = vmatprep.subr.bf16.mxu0 0
    %330 = vmatpush1.bf16.msra.mxu0 0
    %331 = vmatprep.subr.bf16.mxu0 0
    %332 = vmatpush1.bf16.msra.mxu0 0
    %333 = vmatprep.subr.bf16.mxu0 0
    %334 = vmatpush1.bf16.msra.mxu0 0
    %335 = vmatprep.subr.bf16.mxu0 0
    %336 = vmatpush1.bf16.msra.mxu0 0
    %337 = vmatprep.subr.bf16.mxu0 0
    %338 = vmatpush1.bf16.msra.mxu0 0
    %339 = vmatprep.subr.bf16.mxu0 0
    %340 = vmatpush1.bf16.msra.mxu0 0
    %341 = vmatprep.subr.bf16.mxu0 0
    %342 = vmatpush1.bf16.msra.mxu0 0
    %343 = vmatprep.mubr.bf16.mxu0 0
    %344 = vmatmul.mubr.bf16.gmra.mrb[0].mxu0 %v309
    %v345 = vpop.f32.mrb[0].mxu0
    %v346 = vadd.f32 0.0, %v345
    %v347 = vpop.f32.mrb[0].mxu0
    %v348 = vpop.f32.mrb[0].mxu0
    %v349 = vadd.f32 0.0, %v348
    %v350 = vpop.f32.mrb[0].mxu0
    %351 = vdwg.mxu0
    %v352 = vpack.c.bf16 %v349, %v346
    %354 = vrot.lane.b32.xlu0 %v352, 96
    %v355 = vpop.permute.xlu0 %354
    %vm356 = vcmask 64512
    %v358 = vsel %vm356, %v352, 0
    %v361 = vsel %vm356, %v355, 0
    %363 = vmatprep.subr.bf16.mxu0 0
    %364 = vmatpush1.bf16.xpose.msra.mxu0 %v361
    %365 = vmatprep.subr.bf16.mxu0 0
    %366 = vmatpush1.bf16.xpose.msra.mxu0 0
    %367 = vmatprep.subr.bf16.mxu0 0
    %368 = vmatpush1.bf16.xpose.msra.mxu0 0
    %369 = vmatprep.subr.bf16.mxu0 0
    %370 = vmatpush1.bf16.xpose.msra.mxu0 0
    %371 = vmatprep.subr.bf16.mxu0 0
    %372 = vmatpush1.bf16.xpose.msra.mxu0 0
    %373 = vmatprep.subr.bf16.mxu0 0
    %374 = vmatpush1.bf16.xpose.msra.mxu0 0
    %375 = vmatprep.subr.bf16.mxu0 0
    %376 = vmatpush1.bf16.xpose.msra.mxu0 0
    %377 = vmatprep.subr.bf16.mxu0 0
    %378 = vmatpush1.bf16.xpose.msra.mxu0 0
    %379 = vmatprep.subr.bf16.mxu0 0
    %380 = vmatpush1.bf16.xpose.msra.mxu0 0
    %381 = vmatprep.subr.bf16.mxu0 0
    %382 = vmatpush1.bf16.xpose.msra.mxu0 0
    %383 = vmatprep.subr.bf16.mxu0 0
    %384 = vmatpush1.bf16.xpose.msra.mxu0 0
    %385 = vmatprep.subr.bf16.mxu0 0
    %386 = vmatpush1.bf16.xpose.msra.mxu0 0
    %387 = vmatprep.subr.bf16.mxu0 0
    %388 = vmatpush1.bf16.xpose.msra.mxu0 0
    %389 = vmatprep.subr.bf16.mxu0 0
    %390 = vmatpush1.bf16.xpose.msra.mxu0 0
    %391 = vmatprep.subr.bf16.mxu0 0
    %392 = vmatpush1.bf16.xpose.msra.mxu0 0
    %393 = vmatprep.subr.bf16.mxu0 0
    %394 = vmatpush1.bf16.xpose.msra.mxu0 0
    %395 = vmatprep.mubr.bf16.mxu0 0
    %396 = vmatmul.mubr.bf16.gmra.mrb[0].mxu0 %v358
    %v397 = vpop.f32.mrb[0].mxu0
    %v398 = vadd.f32 0.0, %v397
    %v399 = vpop.f32.mrb[0].mxu0
    %v400 = vpop.f32.mrb[0].mxu0
    %v401 = vadd.f32 0.0, %v400
    %v402 = vpop.f32.mrb[0].mxu0
    %403 = vdwg.mxu0
    %404 = vrot.lane.b32.xlu0 %v352, 120
    %v405 = vpop.permute.xlu0 %404
    %406 = vrot.lane.b32.xlu0 %v352, 88
    %v407 = vpop.permute.xlu0 %406
    %v409 = vsel %vm356, %v405, 0
    %v412 = vsel %vm356, %v407, 0
    %414 = vmatprep.subr.bf16.mxu0 0
    %415 = vmatpush1.bf16.xpose.msra.mxu0 %v412
    %416 = vmatprep.subr.bf16.mxu0 0
    %417 = vmatpush1.bf16.xpose.msra.mxu0 0
    %418 = vmatprep.subr.bf16.mxu0 0
    %419 = vmatpush1.bf16.xpose.msra.mxu0 0
    %420 = vmatprep.subr.bf16.mxu0 0
    %421 = vmatpush1.bf16.xpose.msra.mxu0 0
    %422 = vmatprep.subr.bf16.mxu0 0
    %423 = vmatpush1.bf16.xpose.msra.mxu0 0
    %424 = vmatprep.subr.bf16.mxu0 0
    %425 = vmatpush1.bf16.xpose.msra.mxu0 0
    %426 = vmatprep.subr.bf16.mxu0 0
    %427 = vmatpush1.bf16.xpose.msra.mxu0 0
    %428 = vmatprep.subr.bf16.mxu0 0
    %429 = vmatpush1.bf16.xpose.msra.mxu0 0
    %430 = vmatprep.subr.bf16.mxu0 0
    %431 = vmatpush1.bf16.xpose.msra.mxu0 0
    %432 = vmatprep.subr.bf16.mxu0 0
    %433 = vmatpush1.bf16.xpose.msra.mxu0 0
    %434 = vmatprep.subr.bf16.mxu0 0
    %435 = vmatpush1.bf16.xpose.msra.mxu0 0
    %436 = vmatprep.subr.bf16.mxu0 0
    %437 = vmatpush1.bf16.xpose.msra.mxu0 0
    %438 = vmatprep.subr.bf16.mxu0 0
    %439 = vmatpush1.bf16.xpose.msra.mxu0 0
    %440 = vmatprep.subr.bf16.mxu0 0
    %441 = vmatpush1.bf16.xpose.msra.mxu0 0
    %442 = vmatprep.subr.bf16.mxu0 0
    %443 = vmatpush1.bf16.xpose.msra.mxu0 0
    %444 = vmatprep.subr.bf16.mxu0 0
    %445 = vmatpush1.bf16.xpose.msra.mxu0 0
    %446 = vmatprep.mubr.bf16.mxu0 0
    %447 = vmatmul.mubr.bf16.gmra.mrb[0].mxu0 %v409
    %v448 = vpop.f32.mrb[0].mxu0
    %v449 = vadd.f32 0.0, %v448
    %v450 = vpop.f32.mrb[0].mxu0
    %v451 = vpop.f32.mrb[0].mxu0
    %v452 = vadd.f32 0.0, %v451
    %v453 = vpop.f32.mrb[0].mxu0
    %454 = vdwg.mxu0
    %455 = vrot.lane.b32.xlu0 %v352, 112
    %v456 = vpop.permute.xlu0 %455
    %457 = vrot.lane.b32.xlu0 %v352, 80
    %v458 = vpop.permute.xlu0 %457
    %v460 = vsel %vm356, %v456, 0
    %v463 = vsel %vm356, %v458, 0
    %465 = vmatprep.subr.bf16.mxu0 0
    %466 = vmatpush1.bf16.xpose.msra.mxu0 %v463
    %467 = vmatprep.subr.bf16.mxu0 0
    %468 = vmatpush1.bf16.xpose.msra.mxu0 0
    %469 = vmatprep.subr.bf16.mxu0 0
    %470 = vmatpush1.bf16.xpose.msra.mxu0 0
    %471 = vmatprep.subr.bf16.mxu0 0
    %472 = vmatpush1.bf16.xpose.msra.mxu0 0
    %473 = vmatprep.subr.bf16.mxu0 0
    %474 = vmatpush1.bf16.xpose.msra.mxu0 0
    %475 = vmatprep.subr.bf16.mxu0 0
    %476 = vmatpush1.bf16.xpose.msra.mxu0 0
    %477 = vmatprep.subr.bf16.mxu0 0
    %478 = vmatpush1.bf16.xpose.msra.mxu0 0
    %479 = vmatprep.subr.bf16.mxu0 0
    %480 = vmatpush1.bf16.xpose.msra.mxu0 0
    %481 = vmatprep.subr.bf16.mxu0 0
    %482 = vmatpush1.bf16.xpose.msra.mxu0 0
    %483 = vmatprep.subr.bf16.mxu0 0
    %484 = vmatpush1.bf16.xpose.msra.mxu0 0
    %485 = vmatprep.subr.bf16.mxu0 0
    %486 = vmatpush1.bf16.xpose.msra.mxu0 0
    %487 = vmatprep.subr.bf16.mxu0 0
    %488 = vmatpush1.bf16.xpose.msra.mxu0 0
    %489 = vmatprep.subr.bf16.mxu0 0
    %490 = vmatpush1.bf16.xpose.msra.mxu0 0
    %491 = vmatprep.subr.bf16.mxu0 0
    %492 = vmatpush1.bf16.xpose.msra.mxu0 0
    %493 = vmatprep.subr.bf16.mxu0 0
    %494 = vmatpush1.bf16.xpose.msra.mxu0 0
    %495 = vmatprep.subr.bf16.mxu0 0
    %496 = vmatpush1.bf16.xpose.msra.mxu0 0
    %497 = vmatprep.mubr.bf16.mxu0 0
    %498 = vmatmul.mubr.bf16.gmra.mrb[0].mxu0 %v460
    %v499 = vpop.f32.mrb[0].mxu0
    %v500 = vadd.f32 0.0, %v499
    %v501 = vpop.f32.mrb[0].mxu0
    %v502 = vpop.f32.mrb[0].mxu0
    %v503 = vadd.f32 0.0, %v502
    %v504 = vpop.f32.mrb[0].mxu0
    %505 = vdwg.mxu0
    %506 = vrot.lane.b32.xlu0 %v352, 104
    %v507 = vpop.permute.xlu0 %506
    %508 = vrot.lane.b32.xlu0 %v352, 72
    %v509 = vpop.permute.xlu0 %508
    %v511 = vsel %vm356, %v507, 0
    %v514 = vsel %vm356, %v509, 0
    %516 = vmatprep.subr.bf16.mxu0 0
    %517 = vmatpush1.bf16.xpose.msra.mxu0 %v514
    %518 = vmatprep.subr.bf16.mxu0 0
    %519 = vmatpush1.bf16.xpose.msra.mxu0 0
    %520 = vmatprep.subr.bf16.mxu0 0
    %521 = vmatpush1.bf16.xpose.msra.mxu0 0
    %522 = vmatprep.subr.bf16.mxu0 0
    %523 = vmatpush1.bf16.xpose.msra.mxu0 0
    %524 = vmatprep.subr.bf16.mxu0 0
    %525 = vmatpush1.bf16.xpose.msra.mxu0 0
    %526 = vmatprep.subr.bf16.mxu0 0
    %527 = vmatpush1.bf16.xpose.msra.mxu0 0
    %528 = vmatprep.subr.bf16.mxu0 0
    %529 = vmatpush1.bf16.xpose.msra.mxu0 0
    %530 = vmatprep.subr.bf16.mxu0 0
    %531 = vmatpush1.bf16.xpose.msra.mxu0 0
    %532 = vmatprep.subr.bf16.mxu0 0
    %533 = vmatpush1.bf16.xpose.msra.mxu0 0
    %534 = vmatprep.subr.bf16.mxu0 0
    %535 = vmatpush1.bf16.xpose.msra.mxu0 0
    %536 = vmatprep.subr.bf16.mxu0 0
    %537 = vmatpush1.bf16.xpose.msra.mxu0 0
    %538 = vmatprep.subr.bf16.mxu0 0
    %539 = vmatpush1.bf16.xpose.msra.mxu0 0
    %540 = vmatprep.subr.bf16.mxu0 0
    %541 = vmatpush1.bf16.xpose.msra.mxu0 0
    %542 = vmatprep.subr.bf16.mxu0 0
    %543 = vmatpush1.bf16.xpose.msra.mxu0 0
    %544 = vmatprep.subr.bf16.mxu0 0
    %545 = vmatpush1.bf16.xpose.msra.mxu0 0
    %546 = vmatprep.subr.bf16.mxu0 0
    %547 = vmatpush1.bf16.xpose.msra.mxu0 0
    %548 = vmatprep.mubr.bf16.mxu0 0
    %549 = vmatmul.mubr.bf16.gmra.mrb[0].mxu0 %v511
    %v550 = vpop.f32.mrb[0].mxu0
    %v551 = vadd.f32 0.0, %v550
    %v552 = vpop.f32.mrb[0].mxu0
    %v553 = vpop.f32.mrb[0].mxu0
    %v554 = vadd.f32 0.0, %v553
    %v555 = vpop.f32.mrb[0].mxu0
    %556 = vdwg.mxu0
    %v557 = vadd.f32 %v398, %v237
    %v558 = vadd.f32 %v401, %v238
    %v559 = vadd.f32 %v449, %v239
    %v560 = vadd.f32 %v452, %v240
    %v561 = vadd.f32 %v500, %v241
    %v562 = vadd.f32 %v503, %v242
    %v563 = vadd.f32 %v551, %v243
    %v564 = vadd.f32 %v554, %v244
    %vm565 = vcmask 130048
    %v566 = vsel %vm565, %v557, -inf
    %567 = vmax.xlane.f32.xlu0 %v566
    %v568 = vpop.xlane.xlu0 %567
    %v569 = vsel %vm565, %v558, -inf
    %570 = vmax.xlane.f32.xlu0 %v569
    %v571 = vpop.xlane.xlu0 %570
    %v572 = vsel %vm565, %v559, -inf
    %573 = vmax.xlane.f32.xlu0 %v572
    %v574 = vpop.xlane.xlu0 %573
    %v575 = vsel %vm565, %v560, -inf
    %576 = vmax.xlane.f32.xlu0 %v575
    %v577 = vpop.xlane.xlu0 %576
    %v578 = vsel %vm565, %v561, -inf
    %579 = vmax.xlane.f32.xlu0 %v578
    %v580 = vpop.xlane.xlu0 %579
    %v581 = vsel %vm565, %v562, -inf
    %582 = vmax.xlane.f32.xlu0 %v581
    %v583 = vpop.xlane.xlu0 %582
    %v584 = vsel %vm565, %v563, -inf
    %585 = vmax.xlane.f32.xlu0 %v584
    %v586 = vpop.xlane.xlu0 %585
    %v587 = vsel %vm565, %v564, -inf
    %588 = vmax.xlane.f32.xlu0 %v587
    %v589 = vpop.xlane.xlu0 %588
    %v590 = vsub.f32 %v557, %v568
    %v591 = vsub.f32 %v558, %v571
    %v592 = vsub.f32 %v559, %v574
    %v593 = vsub.f32 %v560, %v577
    %v594 = vsub.f32 %v561, %v580
    %v595 = vsub.f32 %v562, %v583
    %v596 = vsub.f32 %v563, %v586
    %v597 = vsub.f32 %v564, %v589
    %v598 = vmul.f32 %v590, 1.442695
    %v599 = vpow.pop %v598
    %v600 = vmul.f32 %v591, 1.442695
    %v601 = vpow.pop %v600
    %v602 = vmul.f32 %v592, 1.442695
    %v603 = vpow.pop %v602
    %v604 = vmul.f32 %v593, 1.442695
    %v605 = vpow.pop %v604
    %v606 = vmul.f32 %v594, 1.442695
    %v607 = vpow.pop %v606
    %v608 = vmul.f32 %v595, 1.442695
    %v609 = vpow.pop %v608
    %v610 = vmul.f32 %v596, 1.442695
    %v611 = vpow.pop %v610
    %v612 = vmul.f32 %v597, 1.442695
    %v613 = vpow.pop %v612
    %v614 = vsel %vm565, %v599, 0.0
    %615 = vadd.xlane.f32.xlu0 %v614
    %v616 = vpop.xlane.xlu0 %615
    %v617 = vsel %vm565, %v601, 0.0
    %618 = vadd.xlane.f32.xlu0 %v617
    %v619 = vpop.xlane.xlu0 %618
    %v620 = vsel %vm565, %v603, 0.0
    %621 = vadd.xlane.f32.xlu0 %v620
    %v622 = vpop.xlane.xlu0 %621
    %v623 = vsel %vm565, %v605, 0.0
    %624 = vadd.xlane.f32.xlu0 %v623
    %v625 = vpop.xlane.xlu0 %624
    %v626 = vsel %vm565, %v607, 0.0
    %627 = vadd.xlane.f32.xlu0 %v626
    %v628 = vpop.xlane.xlu0 %627
    %v629 = vsel %vm565, %v609, 0.0
    %630 = vadd.xlane.f32.xlu0 %v629
    %v631 = vpop.xlane.xlu0 %630
    %v632 = vsel %vm565, %v611, 0.0
    %633 = vadd.xlane.f32.xlu0 %v632
    %v634 = vpop.xlane.xlu0 %633
    %v635 = vsel %vm565, %v613, 0.0
    %636 = vadd.xlane.f32.xlu0 %v635
    %v637 = vpop.xlane.xlu0 %636
    %v638 = vrcp.pop %v616
    %v639 = vrcp.pop %v619
    %v640 = vrcp.pop %v622
    %v641 = vrcp.pop %v625
    %v642 = vrcp.pop %v628
    %v643 = vrcp.pop %v631
    %v644 = vrcp.pop %v634
    %v645 = vrcp.pop %v637
    %v646 = vpack.c.bf16 %v601, %v599
    %v647 = vpack.c.bf16 %v605, %v603
    %v648 = vpack.c.bf16 %v609, %v607
    %v649 = vpack.c.bf16 %v613, %v611
    %650 = vrot.lane.b32.xlu0 %v352, 64
    %v651 = vpop.permute.xlu0 %650
    %v654 = vsel %vm565, %v646, 0
    %656 = vmatprep.subr.bf16.mxu0 0
    %657 = vmatpush1.bf16.msra.mxu0 %v651
    %658 = vmatprep.subr.bf16.mxu0 0
    %659 = vmatpush1.bf16.msra.mxu0 0
    %660 = vmatprep.subr.bf16.mxu0 0
    %661 = vmatpush1.bf16.msra.mxu0 0
    %662 = vmatprep.subr.bf16.mxu0 0
    %663 = vmatpush1.bf16.msra.mxu0 0
    %664 = vmatprep.subr.bf16.mxu0 0
    %665 = vmatpush1.bf16.msra.mxu0 0
    %666 = vmatprep.subr.bf16.mxu0 0
    %667 = vmatpush1.bf16.msra.mxu0 0
    %668 = vmatprep.subr.bf16.mxu0 0
    %669 = vmatpush1.bf16.msra.mxu0 0
    %670 = vmatprep.subr.bf16.mxu0 0
    %671 = vmatpush1.bf16.msra.mxu0 0
    %672 = vmatprep.subr.bf16.mxu0 0
    %673 = vmatpush1.bf16.msra.mxu0 0
    %674 = vmatprep.subr.bf16.mxu0 0
    %675 = vmatpush1.bf16.msra.mxu0 0
    %676 = vmatprep.subr.bf16.mxu0 0
    %677 = vmatpush1.bf16.msra.mxu0 0
    %678 = vmatprep.subr.bf16.mxu0 0
    %679 = vmatpush1.bf16.msra.mxu0 0
    %680 = vmatprep.subr.bf16.mxu0 0
    %681 = vmatpush1.bf16.msra.mxu0 0
    %682 = vmatprep.subr.bf16.mxu0 0
    %683 = vmatpush1.bf16.msra.mxu0 0
    %684 = vmatprep.subr.bf16.mxu0 0
    %685 = vmatpush1.bf16.msra.mxu0 0
    %686 = vmatprep.subr.bf16.mxu0 0
    %687 = vmatpush1.bf16.msra.mxu0 0
    %688 = vmatprep.mubr.bf16.mxu0 0
    %689 = vmatmul.mubr.bf16.gmra.mrb[0].mxu0 %v654
    %v690 = vpop.f32.mrb[0].mxu0
    %v691 = vadd.f32 0.0, %v690
    %v692 = vpop.f32.mrb[0].mxu0
    %v693 = vpop.f32.mrb[0].mxu0
    %v694 = vadd.f32 0.0, %v693
    %v695 = vpop.f32.mrb[0].mxu0
    %696 = vdwg.mxu0
    %v697 = vmul.f32 %v691, %v638
    %v698 = vmul.f32 %v694, %v639
    %699 = vrot.lane.b32.xlu0 %v352, 56
    %v700 = vpop.permute.xlu0 %699
    %v703 = vsel %vm565, %v647, 0
    %705 = vmatprep.subr.bf16.mxu0 0
    %706 = vmatpush1.bf16.msra.mxu0 %v700
    %707 = vmatprep.subr.bf16.mxu0 0
    %708 = vmatpush1.bf16.msra.mxu0 0
    %709 = vmatprep.subr.bf16.mxu0 0
    %710 = vmatpush1.bf16.msra.mxu0 0
    %711 = vmatprep.subr.bf16.mxu0 0
    %712 = vmatpush1.bf16.msra.mxu0 0
    %713 = vmatprep.subr.bf16.mxu0 0
    %714 = vmatpush1.bf16.msra.mxu0 0
    %715 = vmatprep.subr.bf16.mxu0 0
    %716 = vmatpush1.bf16.msra.mxu0 0
    %717 = vmatprep.subr.bf16.mxu0 0
    %718 = vmatpush1.bf16.msra.mxu0 0
    %719 = vmatprep.subr.bf16.mxu0 0
    %720 = vmatpush1.bf16.msra.mxu0 0
    %721 = vmatprep.subr.bf16.mxu0 0
    %722 = vmatpush1.bf16.msra.mxu0 0
    %723 = vmatprep.subr.bf16.mxu0 0
    %724 = vmatpush1.bf16.msra.mxu0 0
    %725 = vmatprep.subr.bf16.mxu0 0
    %726 = vmatpush1.bf16.msra.mxu0 0
    %727 = vmatprep.subr.bf16.mxu0 0
    %728 = vmatpush1.bf16.msra.mxu0 0
    %729 = vmatprep.subr.bf16.mxu0 0
    %730 = vmatpush1.bf16.msra.mxu0 0
    %731 = vmatprep.subr.bf16.mxu0 0
    %732 = vmatpush1.bf16.msra.mxu0 0
    %733 = vmatprep.subr.bf16.mxu0 0
    %734 = vmatpush1.bf16.msra.mxu0 0
    %735 = vmatprep.subr.bf16.mxu0 0
    %736 = vmatpush1.bf16.msra.mxu0 0
    %737 = vmatprep.mubr.bf16.mxu0 0
    %738 = vmatmul.mubr.bf16.gmra.mrb[0].mxu0 %v703
    %v739 = vpop.f32.mrb[0].mxu0
    %v740 = vadd.f32 0.0, %v739
    %v741 = vpop.f32.mrb[0].mxu0
    %v742 = vpop.f32.mrb[0].mxu0
    %v743 = vadd.f32 0.0, %v742
    %v744 = vpop.f32.mrb[0].mxu0
    %745 = vdwg.mxu0
    %v746 = vmul.f32 %v740, %v640
    %v747 = vmul.f32 %v743, %v641
    %748 = vrot.lane.b32.xlu0 %v352, 48
    %v749 = vpop.permute.xlu0 %748
    %v752 = vsel %vm565, %v648, 0
    %754 = vmatprep.subr.bf16.mxu0 0
    %755 = vmatpush1.bf16.msra.mxu0 %v749
    %756 = vmatprep.subr.bf16.mxu0 0
    %757 = vmatpush1.bf16.msra.mxu0 0
    %758 = vmatprep.subr.bf16.mxu0 0
    %759 = vmatpush1.bf16.msra.mxu0 0
    %760 = vmatprep.subr.bf16.mxu0 0
    %761 = vmatpush1.bf16.msra.mxu0 0
    %762 = vmatprep.subr.bf16.mxu0 0
    %763 = vmatpush1.bf16.msra.mxu0 0
    %764 = vmatprep.subr.bf16.mxu0 0
    %765 = vmatpush1.bf16.msra.mxu0 0
    %766 = vmatprep.subr.bf16.mxu0 0
    %767 = vmatpush1.bf16.msra.mxu0 0
    %768 = vmatprep.subr.bf16.mxu0 0
    %769 = vmatpush1.bf16.msra.mxu0 0
    %770 = vmatprep.subr.bf16.mxu0 0
    %771 = vmatpush1.bf16.msra.mxu0 0
    %772 = vmatprep.subr.bf16.mxu0 0
    %773 = vmatpush1.bf16.msra.mxu0 0
    %774 = vmatprep.subr.bf16.mxu0 0
    %775 = vmatpush1.bf16.msra.mxu0 0
    %776 = vmatprep.subr.bf16.mxu0 0
    %777 = vmatpush1.bf16.msra.mxu0 0
    %778 = vmatprep.subr.bf16.mxu0 0
    %779 = vmatpush1.bf16.msra.mxu0 0
    %780 = vmatprep.subr.bf16.mxu0 0
    %781 = vmatpush1.bf16.msra.mxu0 0
    %782 = vmatprep.subr.bf16.mxu0 0
    %783 = vmatpush1.bf16.msra.mxu0 0
    %784 = vmatprep.subr.bf16.mxu0 0
    %785 = vmatpush1.bf16.msra.mxu0 0
    %786 = vmatprep.mubr.bf16.mxu0 0
    %787 = vmatmul.mubr.bf16.gmra.mrb[0].mxu0 %v752
    %v788 = vpop.f32.mrb[0].mxu0
    %v789 = vadd.f32 0.0, %v788
    %v790 = vpop.f32.mrb[0].mxu0
    %v791 = vpop.f32.mrb[0].mxu0
    %v792 = vadd.f32 0.0, %v791
    %v793 = vpop.f32.mrb[0].mxu0
    %794 = vdwg.mxu0
    %v795 = vmul.f32 %v789, %v642
    %v796 = vmul.f32 %v792, %v643
    %797 = vrot.lane.b32.xlu0 %v352, 40
    %v798 = vpop.permute.xlu0 %797
    %v801 = vsel %vm565, %v649, 0
    %803 = vmatprep.subr.bf16.mxu0 0
    %804 = vmatpush1.bf16.msra.mxu0 %v798
    %805 = vmatprep.subr.bf16.mxu0 0
    %806 = vmatpush1.bf16.msra.mxu0 0
    %807 = vmatprep.subr.bf16.mxu0 0
    %808 = vmatpush1.bf16.msra.mxu0 0
    %809 = vmatprep.subr.bf16.mxu0 0
    %810 = vmatpush1.bf16.msra.mxu0 0
    %811 = vmatprep.subr.bf16.mxu0 0
    %812 = vmatpush1.bf16.msra.mxu0 0
    %813 = vmatprep.subr.bf16.mxu0 0
    %814 = vmatpush1.bf16.msra.mxu0 0
    %815 = vmatprep.subr.bf16.mxu0 0
    %816 = vmatpush1.bf16.msra.mxu0 0
    %817 = vmatprep.subr.bf16.mxu0 0
    %818 = vmatpush1.bf16.msra.mxu0 0
    %819 = vmatprep.subr.bf16.mxu0 0
    %820 = vmatpush1.bf16.msra.mxu0 0
    %821 = vmatprep.subr.bf16.mxu0 0
    %822 = vmatpush1.bf16.msra.mxu0 0
    %823 = vmatprep.subr.bf16.mxu0 0
    %824 = vmatpush1.bf16.msra.mxu0 0
    %825 = vmatprep.subr.bf16.mxu0 0
    %826 = vmatpush1.bf16.msra.mxu0 0
    %827 = vmatprep.subr.bf16.mxu0 0
    %828 = vmatpush1.bf16.msra.mxu0 0
    %829 = vmatprep.subr.bf16.mxu0 0
    %830 = vmatpush1.bf16.msra.mxu0 0
    %831 = vmatprep.subr.bf16.mxu0 0
    %832 = vmatpush1.bf16.msra.mxu0 0
    %833 = vmatprep.subr.bf16.mxu0 0
    %834 = vmatpush1.bf16.msra.mxu0 0
    %835 = vmatprep.mubr.bf16.mxu0 0
    %836 = vmatmul.mubr.bf16.gmra.mrb[0].mxu0 %v801
    %v837 = vpop.f32.mrb[0].mxu0
    %v838 = vadd.f32 0.0, %v837
    %v839 = vpop.f32.mrb[0].mxu0
    %v840 = vpop.f32.mrb[0].mxu0
    %v841 = vadd.f32 0.0, %v840
    %v842 = vpop.f32.mrb[0].mxu0
    %843 = vdwg.mxu0
    %v844 = vmul.f32 %v838, %v644
    %v845 = vmul.f32 %v841, %v645
    %848 = vrot.lane.b32.xlu0 %v746, 8
    %v849 = vpop.permute.xlu0 %848
    %850 = vrot.lane.b32.xlu0 %v747, 8
    %v851 = vpop.permute.xlu0 %850
    %856 = vrot.lane.b32.xlu0 %v795, 16
    %v857 = vpop.permute.xlu0 %856
    %858 = vrot.lane.b32.xlu0 %v796, 16
    %v859 = vpop.permute.xlu0 %858
    %864 = vrot.lane.b32.xlu0 %v844, 24
    %v865 = vpop.permute.xlu0 %864
    %866 = vrot.lane.b32.xlu0 %v845, 24
    %v867 = vpop.permute.xlu0 %866
    %v870 = vsel %vm356, %v697, %v849
    %v871 = vsel %vm356, %v698, %v851
    %v872 = vsel %vm565, %v870, %v857
    %v873 = vsel %vm565, %v871, %v859
    %vm874 = vcmask 195584
    %v875 = vsel %vm874, %v872, %v865
    %v876 = vsel %vm874, %v873, %v867
    %v877 = vpack.c.bf16 %v876, %v875
    %v878 = vld [vmem:[#allocation7] sm:$0xf]
    %v879 = vld [vmem:[#allocation7 + $0x4] sm:$0xf]
    %v880 = vld [vmem:[#allocation7 + $0x8] sm:$0xf]
    %v881 = vld [vmem:[#allocation7 + $0xc] sm:$0xf]
    %v886 = vunpack.c.l.b16 %v878
    %v887 = vunpack.c.l.b16 %v879
    %v888 = vunpack.c.l.b16 %v880
    %v889 = vunpack.c.l.b16 %v881
    %v890 = vpack.c.b16 %v887, %v886
    %v891 = vpack.c.b16 %v889, %v888
    %v895 = vsel %vm247, %v877, 0
    %897 = vmatprep.subr.bf16.mxu0 0
    %898 = vmatpush1.bf16.msra.mxu0 %v890
    %899 = vmatprep.subr.bf16.mxu0 0
    %900 = vmatpush1.bf16.msra.mxu0 %v891
    %901 = vmatprep.subr.bf16.mxu0 0
    %902 = vmatpush1.bf16.msra.mxu0 0
    %903 = vmatprep.subr.bf16.mxu0 0
    %904 = vmatpush1.bf16.msra.mxu0 0
    %905 = vmatprep.subr.bf16.mxu0 0
    %906 = vmatpush1.bf16.msra.mxu0 0
    %907 = vmatprep.subr.bf16.mxu0 0
    %908 = vmatpush1.bf16.msra.mxu0 0
    %909 = vmatprep.subr.bf16.mxu0 0
    %910 = vmatpush1.bf16.msra.mxu0 0
    %911 = vmatprep.subr.bf16.mxu0 0
    %912 = vmatpush1.bf16.msra.mxu0 0
    %913 = vmatprep.subr.bf16.mxu0 0
    %914 = vmatpush1.bf16.msra.mxu0 0
    %915 = vmatprep.subr.bf16.mxu0 0
    %916 = vmatpush1.bf16.msra.mxu0 0
    %917 = vmatprep.subr.bf16.mxu0 0
    %918 = vmatpush1.bf16.msra.mxu0 0
    %919 = vmatprep.subr.bf16.mxu0 0
    %920 = vmatpush1.bf16.msra.mxu0 0
    %921 = vmatprep.subr.bf16.mxu0 0
    %922 = vmatpush1.bf16.msra.mxu0 0
    %923 = vmatprep.subr.bf16.mxu0 0
    %924 = vmatpush1.bf16.msra.mxu0 0
    %925 = vmatprep.subr.bf16.mxu0 0
    %926 = vmatpush1.bf16.msra.mxu0 0
    %927 = vmatprep.subr.bf16.mxu0 0
    %928 = vmatpush1.bf16.msra.mxu0 0
    %929 = vmatprep.mubr.bf16.mxu0 0
    %930 = vmatmul.mubr.bf16.gmra.mrb[0].mxu0 %v895
    %v931 = vpop.f32.mrb[0].mxu0
    %v932 = vadd.f32 0.0, %v931
    %v933 = vpop.f32.mrb[0].mxu0
    %v934 = vpop.f32.mrb[0].mxu0
    %v935 = vadd.f32 0.0, %v934
    %v936 = vpop.f32.mrb[0].mxu0
    %937 = vdwg.mxu0
    %v938 = vadd.f32 %v235, %v932
    %v939 = vadd.f32 %v236, %v935
    %v940 = vld [vmem:[#allocation8] sm:$0x1]
    %v942 = vlaneseq
    %v943 = vshrl.u32 %v942, 7
    %v944 = vsub.s32 0, %v943
    %v945 = vrot.slane %v940, %v944
    %v947 = vadd.f32 %v938, %v945
    %v948 = vadd.f32 %v939, %v945
    %v949 = vld [vmem:[#allocation10] sm:$0x1]
    %v950 = vld [vmem:[#allocation11] sm:$0x1]
    %v951 = vsel %vm247, %v947, 0.0
    %952 = vadd.xlane.f32.xlu0 %v951
    %v953 = vpop.xlane.xlu0 %952
    %v954 = vsel %vm247, %v948, 0.0
    %955 = vadd.xlane.f32.xlu0 %v954
    %v956 = vpop.xlane.xlu0 %955
    %v957 = vmul.f32 %v953, %v254
    %v958 = vmul.f32 %v956, %v254
    %v959 = vsub.f32 %v947, %v957
    %v960 = vsub.f32 %v948, %v958
    %v961 = vmul.f32 %v959, %v959
    %v962 = vmul.f32 %v960, %v960
    %v963 = vsel %vm247, %v961, 0.0
    %964 = vadd.xlane.f32.xlu0 %v963
    %v965 = vpop.xlane.xlu0 %964
    %v966 = vsel %vm247, %v962, 0.0
    %967 = vadd.xlane.f32.xlu0 %v966
    %v968 = vpop.xlane.xlu0 %967
    %v969 = vmul.f32 %v965, %v254
    %v970 = vmul.f32 %v968, %v254
    %v971 = vadd.f32 %v969, 1e-05
    %v972 = vadd.f32 %v970, 1e-05
    %v973 = vrsqrt.pop %v971
    %v974 = vrsqrt.pop %v972
    %v975 = vmul.f32 %v959, %v973
    %v976 = vmul.f32 %v960, %v974
    %v978 = vlaneseq
    %v979 = vshrl.u32 %v978, 7
    %v980 = vsub.s32 0, %v979
    %v981 = vrot.slane %v949, %v980
    %v983 = vmul.f32 %v975, %v981
    %v984 = vmul.f32 %v976, %v981
    %v986 = vlaneseq
    %v987 = vshrl.u32 %v986, 7
    %v988 = vsub.s32 0, %v987
    %v989 = vrot.slane %v950, %v988
    %v991 = vadd.f32 %v983, %v989
    %v992 = vadd.f32 %v984, %v989
    %v993 = vpack.c.bf16 %v992, %v991
    %v994 = vld [vmem:[#allocation13] sm:$0xf]
    %v995 = vld [vmem:[#allocation13 + $0x4] sm:$0xf]
    %v996 = vld [vmem:[#allocation13 + $0x8] sm:$0xf]
    %v997 = vld [vmem:[#allocation13 + $0xc] sm:$0xf]
    %v998 = vld [vmem:[#allocation14] sm:$0x1]
    %v1000 = vlaneseq
    %v1001 = vshrl.u32 %v1000, 7
    %v1002 = vsub.s32 0, %v1001
    %v1003 = vrot.slane %v998, %v1002
    %v1009 = vunpack.c.l.b16 %v994
    %v1010 = vunpack.c.l.b16 %v995
    %v1011 = vunpack.c.l.b16 %v996
    %v1012 = vunpack.c.l.b16 %v997
    %v1013 = vpack.c.b16 %v1010, %v1009
    %v1014 = vpack.c.b16 %v1012, %v1011
    %v1018 = vsel %vm247, %v993, 0
    %1020 = vmatprep.subr.bf16.mxu0 0
    %1021 = vmatpush1.bf16.msra.mxu0 %v1013
    %1022 = vmatprep.subr.bf16.mxu0 0
    %1023 = vmatpush1.bf16.msra.mxu0 %v1014
    %1024 = vmatprep.subr.bf16.mxu0 0
    %1025 = vmatpush1.bf16.msra.mxu0 0
    %1026 = vmatprep.subr.bf16.mxu0 0
    %1027 = vmatpush1.bf16.msra.mxu0 0
    %1028 = vmatprep.subr.bf16.mxu0 0
    %1029 = vmatpush1.bf16.msra.mxu0 0
    %1030 = vmatprep.subr.bf16.mxu0 0
    %1031 = vmatpush1.bf16.msra.mxu0 0
    %1032 = vmatprep.subr.bf16.mxu0 0
    %1033 = vmatpush1.bf16.msra.mxu0 0
    %1034 = vmatprep.subr.bf16.mxu0 0
    %1035 = vmatpush1.bf16.msra.mxu0 0
    %1036 = vmatprep.subr.bf16.mxu0 0
    %1037 = vmatpush1.bf16.msra.mxu0 0
    %1038 = vmatprep.subr.bf16.mxu0 0
    %1039 = vmatpush1.bf16.msra.mxu0 0
    %1040 = vmatprep.subr.bf16.mxu0 0
    %1041 = vmatpush1.bf16.msra.mxu0 0
    %1042 = vmatprep.subr.bf16.mxu0 0
    %1043 = vmatpush1.bf16.msra.mxu0 0
    %1044 = vmatprep.subr.bf16.mxu0 0
    %1045 = vmatpush1.bf16.msra.mxu0 0
    %1046 = vmatprep.subr.bf16.mxu0 0
    %1047 = vmatpush1.bf16.msra.mxu0 0
    %1048 = vmatprep.subr.bf16.mxu0 0
    %1049 = vmatpush1.bf16.msra.mxu0 0
    %1050 = vmatprep.subr.bf16.mxu0 0
    %1051 = vmatpush1.bf16.msra.mxu0 0
    %1052 = vmatprep.mubr.bf16.mxu0 0
    %1053 = vmatmul.mubr.bf16.gmra.mrb[0].mxu0 %v1018
    %v1054 = vpop.f32.mrb[0].mxu0
    %v1055 = vadd.f32 %v1003, %v1054
    %v1056 = vpop.f32.mrb[0].mxu0
    %v1057 = vpop.f32.mrb[0].mxu0
    %v1058 = vadd.f32 %v1003, %v1057
    %v1059 = vpop.f32.mrb[0].mxu0
    %1060 = vdwg.mxu0
    %v1061 = vmul.f32 %v1055, 0.5
    %v1062 = vmul.f32 %v1058, 0.5
    %v1063 = vmul.f32 %v1055, 0.70710677
    %v1064 = vmul.f32 %v1058, 0.70710677
    %v1065 = verf.f32.pop %v1063
    %v1066 = verf.f32.pop %v1064
    %v1067 = vadd.f32 %v1065, 1.0
    %v1068 = vadd.f32 %v1066, 1.0
    %v1069 = vmul.f32 %v1061, %v1067
    %v1070 = vmul.f32 %v1062, %v1068
    %v1071 = vpack.c.bf16 %v1070, %v1069
    %v1072 = vld [vmem:[%s11] sm:$0xf]
    %v1073 = vld [vmem:[%s11 + $0x4] sm:$0xf]
    %v1074 = vld [vmem:[%s11 + $0x8] sm:$0xf]
    %v1075 = vld [vmem:[%s11 + $0xc] sm:$0xf]
    %v1076 = vld [vmem:[%s11 + $0x10] sm:$0xf]
    %v1077 = vld [vmem:[%s11 + $0x14] sm:$0xf]
    %v1078 = vld [vmem:[%s11 + $0x18] sm:$0xf]
    %v1079 = vld [vmem:[%s11 + $0x1c] sm:$0xf]
    %v1088 = vunpack.c.l.b16 %v1072
    %v1089 = vunpack.c.l.b16 %v1073
    %v1090 = vunpack.c.l.b16 %v1074
    %v1091 = vunpack.c.l.b16 %v1075
    %v1092 = vunpack.c.l.b16 %v1076
    %v1093 = vunpack.c.l.b16 %v1077
    %v1094 = vunpack.c.l.b16 %v1078
    %v1095 = vunpack.c.l.b16 %v1079
    %v1096 = vpack.c.b16 %v1089, %v1088
    %v1097 = vpack.c.b16 %v1091, %v1090
    %v1098 = vpack.c.b16 %v1093, %v1092
    %v1099 = vpack.c.b16 %v1095, %v1094
    %vm1104 = vcmask 523264
    %v1106 = vsel %vm1104, %v1071, 0
    %1108 = vmatprep.subr.bf16.mxu0 0
    %1109 = vmatpush1.bf16.msra.mxu0 %v1096
    %1110 = vmatprep.subr.bf16.mxu0 0
    %1111 = vmatpush1.bf16.msra.mxu0 %v1097
    %1112 = vmatprep.subr.bf16.mxu0 0
    %1113 = vmatpush1.bf16.msra.mxu0 %v1098
    %1114 = vmatprep.subr.bf16.mxu0 0
    %1115 = vmatpush1.bf16.msra.mxu0 %v1099
    %1116 = vmatprep.subr.bf16.mxu0 0
    %1117 = vmatpush1.bf16.msra.mxu0 0
    %1118 = vmatprep.subr.bf16.mxu0 0
    %1119 = vmatpush1.bf16.msra.mxu0 0
    %1120 = vmatprep.subr.bf16.mxu0 0
    %1121 = vmatpush1.bf16.msra.mxu0 0
    %1122 = vmatprep.subr.bf16.mxu0 0
    %1123 = vmatpush1.bf16.msra.mxu0 0
    %1124 = vmatprep.subr.bf16.mxu0 0
    %1125 = vmatpush1.bf16.msra.mxu0 0
    %1126 = vmatprep.subr.bf16.mxu0 0
    %1127 = vmatpush1.bf16.msra.mxu0 0
    %1128 = vmatprep.subr.bf16.mxu0 0
    %1129 = vmatpush1.bf16.msra.mxu0 0
    %1130 = vmatprep.subr.bf16.mxu0 0
    %1131 = vmatpush1.bf16.msra.mxu0 0
    %1132 = vmatprep.subr.bf16.mxu0 0
    %1133 = vmatpush1.bf16.msra.mxu0 0
    %1134 = vmatprep.subr.bf16.mxu0 0
    %1135 = vmatpush1.bf16.msra.mxu0 0
    %1136 = vmatprep.subr.bf16.mxu0 0
    %1137 = vmatpush1.bf16.msra.mxu0 0
    %1138 = vmatprep.subr.bf16.mxu0 0
    %1139 = vmatpush1.bf16.msra.mxu0 0
    %1140 = vmatprep.mubr.bf16.mxu0 0
    %1141 = vmatmul.mubr.bf16.gmra.mrb[0].mxu0 %v1106
    %v1142 = vpop.f32.mrb[0].mxu0
    %v1143 = vadd.f32 0.0, %v1142
    %v1144 = vpop.f32.mrb[0].mxu0
    %v1145 = vpop.f32.mrb[0].mxu0
    %v1146 = vadd.f32 0.0, %v1145
    %v1147 = vpop.f32.mrb[0].mxu0
    %1148 = vdwg.mxu0
    %v1149 = vadd.f32 %v947, %v1143
    %v1150 = vadd.f32 %v948, %v1146
    %v1151 = vld [vmem:[#allocation16] sm:$0x1]
    %v1153 = vlaneseq
    %v1154 = vshrl.u32 %v1153, 7
    %v1155 = vsub.s32 0, %v1154
    %v1156 = vrot.slane %v1151, %v1155
    %v1158 = vadd.f32 %v1149, %v1156
    %v1159 = vadd.f32 %v1150, %v1156
    %v1160 = vld [vmem:[#allocation17] sm:$0x1]
    %v1161 = vld [vmem:[#allocation19] sm:$0x1]
    %v1162 = vsel %vm247, %v1158, 0.0
    %1163 = vadd.xlane.f32.xlu0 %v1162
    %v1164 = vpop.xlane.xlu0 %1163
    %v1165 = vsel %vm247, %v1159, 0.0
    %1166 = vadd.xlane.f32.xlu0 %v1165
    %v1167 = vpop.xlane.xlu0 %1166
    %v1168 = vmul.f32 %v1164, %v254
    %v1169 = vmul.f32 %v1167, %v254
    %v1170 = vsub.f32 %v1158, %v1168
    %v1171 = vsub.f32 %v1159, %v1169
    %v1172 = vmul.f32 %v1170, %v1170
    %v1173 = vmul.f32 %v1171, %v1171
    %v1174 = vsel %vm247, %v1172, 0.0
    %1175 = vadd.xlane.f32.xlu0 %v1174
    %v1176 = vpop.xlane.xlu0 %1175
    %v1177 = vsel %vm247, %v1173, 0.0
    %1178 = vadd.xlane.f32.xlu0 %v1177
    %v1179 = vpop.xlane.xlu0 %1178
    %v1180 = vmul.f32 %v1176, %v254
    %v1181 = vmul.f32 %v1179, %v254
    %v1182 = vadd.f32 %v1180, 1e-05
    %v1183 = vadd.f32 %v1181, 1e-05
    %v1184 = vrsqrt.pop %v1182
    %v1185 = vrsqrt.pop %v1183
    %v1186 = vmul.f32 %v1170, %v1184
    %v1187 = vmul.f32 %v1171, %v1185
    %v1189 = vlaneseq
    %v1190 = vshrl.u32 %v1189, 7
    %v1191 = vsub.s32 0, %v1190
    %v1192 = vrot.slane %v1160, %v1191
    %v1194 = vmul.f32 %v1186, %v1192
    %v1195 = vmul.f32 %v1187, %v1192
    %v1197 = vlaneseq
    %v1198 = vshrl.u32 %v1197, 7
    %v1199 = vsub.s32 0, %v1198
    %v1200 = vrot.slane %v1161, %v1199
    %v1202 = vadd.f32 %v1194, %v1200
    %v1203 = vadd.f32 %v1195, %v1200
    %v1204 = vpack.c.bf16 %v1203, %v1202
    %v1205 = vld [vmem:[%s15] sm:$0xf]
    %v1206 = vld [vmem:[%s15 + $0x4] sm:$0xf]
    %v1207 = vld [vmem:[%s15 + $0x8] sm:$0xf]
    %v1208 = vld [vmem:[%s15 + $0xc] sm:$0xf]
    %v1213 = vunpack.c.l.b16 %v1205
    %v1214 = vunpack.c.l.b16 %v1206
    %v1215 = vunpack.c.l.b16 %v1207
    %v1216 = vunpack.c.l.b16 %v1208
    %v1217 = vpack.c.b16 %v1214, %v1213
    %v1218 = vpack.c.b16 %v1216, %v1215
    %v1222 = vsel %vm247, %v1204, 0
    %1224 = vmatprep.subr.bf16.mxu0 0
    %1225 = vmatpush1.bf16.msra.mxu0 %v1217
    %1226 = vmatprep.subr.bf16.mxu0 0
    %1227 = vmatpush1.bf16.msra.mxu0 %v1218
    %1228 = vmatprep.subr.bf16.mxu0 0
    %1229 = vmatpush1.bf16.msra.mxu0 0
    %1230 = vmatprep.subr.bf16.mxu0 0
    %1231 = vmatpush1.bf16.msra.mxu0 0
    %1232 = vmatprep.subr.bf16.mxu0 0
    %1233 = vmatpush1.bf16.msra.mxu0 0
    %1234 = vmatprep.subr.bf16.mxu0 0
    %1235 = vmatpush1.bf16.msra.mxu0 0
    %1236 = vmatprep.subr.bf16.mxu0 0
    %1237 = vmatpush1.bf16.msra.mxu0 0
    %1238 = vmatprep.subr.bf16.mxu0 0
    %1239 = vmatpush1.bf16.msra.mxu0 0
    %1240 = vmatprep.subr.bf16.mxu0 0
    %1241 = vmatpush1.bf16.msra.mxu0 0
    %1242 = vmatprep.subr.bf16.mxu0 0
    %1243 = vmatpush1.bf16.msra.mxu0 0
    %1244 = vmatprep.subr.bf16.mxu0 0
    %1245 = vmatpush1.bf16.msra.mxu0 0
    %1246 = vmatprep.subr.bf16.mxu0 0
    %1247 = vmatpush1.bf16.msra.mxu0 0
    %1248 = vmatprep.subr.bf16.mxu0 0
    %1249 = vmatpush1.bf16.msra.mxu0 0
    %1250 = vmatprep.subr.bf16.mxu0 0
    %1251 = vmatpush1.bf16.msra.mxu0 0
    %1252 = vmatprep.subr.bf16.mxu0 0
    %1253 = vmatpush1.bf16.msra.mxu0 0
    %1254 = vmatprep.subr.bf16.mxu0 0
    %1255 = vmatpush1.bf16.msra.mxu0 0
    %1256 = vmatprep.mubr.bf16.mxu0 0
    %1257 = vmatmul.mubr.bf16.gmra.mrb[0].mxu0 %v1222
    %v1258 = vpop.f32.mrb[0].mxu0
    %v1259 = vadd.f32 0.0, %v1258
    %v1260 = vpop.f32.mrb[0].mxu0
    %v1261 = vpop.f32.mrb[0].mxu0
    %v1262 = vadd.f32 0.0, %v1261
    %v1263 = vpop.f32.mrb[0].mxu0
    %1264 = vdwg.mxu0
    %v1265 = vpack.c.bf16 %v1262, %v1259
    %1267 = vrot.lane.b32.xlu0 %v1265, 96
    %v1268 = vpop.permute.xlu0 %1267
    %v1270 = vsel %vm356, %v1265, 0
    %v1273 = vsel %vm356, %v1268, 0
    %1275 = vmatprep.subr.bf16.mxu0 0
    %1276 = vmatpush1.bf16.xpose.msra.mxu0 %v1273
    %1277 = vmatprep.subr.bf16.mxu0 0
    %1278 = vmatpush1.bf16.xpose.msra.mxu0 0
    %1279 = vmatprep.subr.bf16.mxu0 0
    %1280 = vmatpush1.bf16.xpose.msra.mxu0 0
    %1281 = vmatprep.subr.bf16.mxu0 0
    %1282 = vmatpush1.bf16.xpose.msra.mxu0 0
    %1283 = vmatprep.subr.bf16.mxu0 0
    %1284 = vmatpush1.bf16.xpose.msra.mxu0 0
    %1285 = vmatprep.subr.bf16.mxu0 0
    %1286 = vmatpush1.bf16.xpose.msra.mxu0 0
    %1287 = vmatprep.subr.bf16.mxu0 0
    %1288 = vmatpush1.bf16.xpose.msra.mxu0 0
    %1289 = vmatprep.subr.bf16.mxu0 0
    %1290 = vmatpush1.bf16.xpose.msra.mxu0 0
    %1291 = vmatprep.subr.bf16.mxu0 0
    %1292 = vmatpush1.bf16.xpose.msra.mxu0 0
    %1293 = vmatprep.subr.bf16.mxu0 0
    %1294 = vmatpush1.bf16.xpose.msra.mxu0 0
    %1295 = vmatprep.subr.bf16.mxu0 0
    %1296 = vmatpush1.bf16.xpose.msra.mxu0 0
    %1297 = vmatprep.subr.bf16.mxu0 0
    %1298 = vmatpush1.bf16.xpose.msra.mxu0 0
    %1299 = vmatprep.subr.bf16.mxu0 0
    %1300 = vmatpush1.bf16.xpose.msra.mxu0 0
    %1301 = vmatprep.subr.bf16.mxu0 0
    %1302 = vmatpush1.bf16.xpose.msra.mxu0 0
    %1303 = vmatprep.subr.bf16.mxu0 0
    %1304 = vmatpush1.bf16.xpose.msra.mxu0 0
    %1305 = vmatprep.subr.bf16.mxu0 0
    %1306 = vmatpush1.bf16.xpose.msra.mxu0 0
    %1307 = vmatprep.mubr.bf16.mxu0 0
    %1308 = vmatmul.mubr.bf16.gmra.mrb[0].mxu0 %v1270
    %v1309 = vpop.f32.mrb[0].mxu0
    %v1310 = vadd.f32 0.0, %v1309
    %v1311 = vpop.f32.mrb[0].mxu0
    %v1312 = vpop.f32.mrb[0].mxu0
    %v1313 = vadd.f32 0.0, %v1312
    %v1314 = vpop.f32.mrb[0].mxu0
    %1315 = vdwg.mxu0
    %1316 = vrot.lane.b32.xlu0 %v1265, 120
    %v1317 = vpop.permute.xlu0 %1316
    %1318 = vrot.lane.b32.xlu0 %v1265, 88
    %v1319 = vpop.permute.xlu0 %1318
    %v1321 = vsel %vm356, %v1317, 0
    %v1324 = vsel %vm356, %v1319, 0
    %1326 = vmatprep.subr.bf16.mxu0 0
    %1327 = vmatpush1.bf16.xpose.msra.mxu0 %v1324
    %1328 = vmatprep.subr.bf16.mxu0 0
    %1329 = vmatpush1.bf16.xpose.msra.mxu0 0
    %1330 = vmatprep.subr.bf16.mxu0 0
    %1331 = vmatpush1.bf16.xpose.msra.mxu0 0
    %1332 = vmatprep.subr.bf16.mxu0 0
    %1333 = vmatpush1.bf16.xpose.msra.mxu0 0
    %1334 = vmatprep.subr.bf16.mxu0 0
    %1335 = vmatpush1.bf16.xpose.msra.mxu0 0
    %1336 = vmatprep.subr.bf16.mxu0 0
    %1337 = vmatpush1.bf16.xpose.msra.mxu0 0
    %1338 = vmatprep.subr.bf16.mxu0 0
    %1339 = vmatpush1.bf16.xpose.msra.mxu0 0
    %1340 = vmatprep.subr.bf16.mxu0 0
    %1341 = vmatpush1.bf16.xpose.msra.mxu0 0
    %1342 = vmatprep.subr.bf16.mxu0 0
    %1343 = vmatpush1.bf16.xpose.msra.mxu0 0
    %1344 = vmatprep.subr.bf16.mxu0 0
    %1345 = vmatpush1.bf16.xpose.msra.mxu0 0
    %1346 = vmatprep.subr.bf16.mxu0 0
    %1347 = vmatpush1.bf16.xpose.msra.mxu0 0
    %1348 = vmatprep.subr.bf16.mxu0 0
    %1349 = vmatpush1.bf16.xpose.msra.mxu0 0
    %1350 = vmatprep.subr.bf16.mxu0 0
    %1351 = vmatpush1.bf16.xpose.msra.mxu0 0
    %1352 = vmatprep.subr.bf16.mxu0 0
    %1353 = vmatpush1.bf16.xpose.msra.mxu0 0
    %1354 = vmatprep.subr.bf16.mxu0 0
    %1355 = vmatpush1.bf16.xpose.msra.mxu0 0
    %1356 = vmatprep.subr.bf16.mxu0 0
    %1357 = vmatpush1.bf16.xpose.msra.mxu0 0
    %1358 = vmatprep.mubr.bf16.mxu0 0
    %1359 = vmatmul.mubr.bf16.gmra.mrb[0].mxu0 %v1321
    %v1360 = vpop.f32.mrb[0].mxu0
    %v1361 = vadd.f32 0.0, %v1360
    %v1362 = vpop.f32.mrb[0].mxu0
    %v1363 = vpop.f32.mrb[0].mxu0
    %v1364 = vadd.f32 0.0, %v1363
    %v1365 = vpop.f32.mrb[0].mxu0
    %1366 = vdwg.mxu0
    %1367 = vrot.lane.b32.xlu0 %v1265, 112
    %v1368 = vpop.permute.xlu0 %1367
    %1369 = vrot.lane.b32.xlu0 %v1265, 80
    %v1370 = vpop.permute.xlu0 %1369
    %v1372 = vsel %vm356, %v1368, 0
    %v1375 = vsel %vm356, %v1370, 0
    %1377 = vmatprep.subr.bf16.mxu0 0
    %1378 = vmatpush1.bf16.xpose.msra.mxu0 %v1375
    %1379 = vmatprep.subr.bf16.mxu0 0
    %1380 = vmatpush1.bf16.xpose.msra.mxu0 0
    %1381 = vmatprep.subr.bf16.mxu0 0
    %1382 = vmatpush1.bf16.xpose.msra.mxu0 0
    %1383 = vmatprep.subr.bf16.mxu0 0
    %1384 = vmatpush1.bf16.xpose.msra.mxu0 0
    %1385 = vmatprep.subr.bf16.mxu0 0
    %1386 = vmatpush1.bf16.xpose.msra.mxu0 0
    %1387 = vmatprep.subr.bf16.mxu0 0
    %1388 = vmatpush1.bf16.xpose.msra.mxu0 0
    %1389 = vmatprep.subr.bf16.mxu0 0
    %1390 = vmatpush1.bf16.xpose.msra.mxu0 0
    %1391 = vmatprep.subr.bf16.mxu0 0
    %1392 = vmatpush1.bf16.xpose.msra.mxu0 0
    %1393 = vmatprep.subr.bf16.mxu0 0
    %1394 = vmatpush1.bf16.xpose.msra.mxu0 0
    %1395 = vmatprep.subr.bf16.mxu0 0
    %1396 = vmatpush1.bf16.xpose.msra.mxu0 0
    %1397 = vmatprep.subr.bf16.mxu0 0
    %1398 = vmatpush1.bf16.xpose.msra.mxu0 0
    %1399 = vmatprep.subr.bf16.mxu0 0
    %1400 = vmatpush1.bf16.xpose.msra.mxu0 0
    %1401 = vmatprep.subr.bf16.mxu0 0
    %1402 = vmatpush1.bf16.xpose.msra.mxu0 0
    %1403 = vmatprep.subr.bf16.mxu0 0
    %1404 = vmatpush1.bf16.xpose.msra.mxu0 0
    %1405 = vmatprep.subr.bf16.mxu0 0
    %1406 = vmatpush1.bf16.xpose.msra.mxu0 0
    %1407 = vmatprep.subr.bf16.mxu0 0
    %1408 = vmatpush1.bf16.xpose.msra.mxu0 0
    %1409 = vmatprep.mubr.bf16.mxu0 0
    %1410 = vmatmul.mubr.bf16.gmra.mrb[0].mxu0 %v1372
    %v1411 = vpop.f32.mrb[0].mxu0
    %v1412 = vadd.f32 0.0, %v1411
    %v1413 = vpop.f32.mrb[0].mxu0
    %v1414 = vpop.f32.mrb[0].mxu0
    %v1415 = vadd.f32 0.0, %v1414
    %v1416 = vpop.f32.mrb[0].mxu0
    %1417 = vdwg.mxu0
    %1418 = vrot.lane.b32.xlu0 %v1265, 104
    %v1419 = vpop.permute.xlu0 %1418
    %1420 = vrot.lane.b32.xlu0 %v1265, 72
    %v1421 = vpop.permute.xlu0 %1420
    %v1423 = vsel %vm356, %v1419, 0
    %v1426 = vsel %vm356, %v1421, 0
    %1428 = vmatprep.subr.bf16.mxu0 0
    %1429 = vmatpush1.bf16.xpose.msra.mxu0 %v1426
    %1430 = vmatprep.subr.bf16.mxu0 0
    %1431 = vmatpush1.bf16.xpose.msra.mxu0 0
    %1432 = vmatprep.subr.bf16.mxu0 0
    %1433 = vmatpush1.bf16.xpose.msra.mxu0 0
    %1434 = vmatprep.subr.bf16.mxu0 0
    %1435 = vmatpush1.bf16.xpose.msra.mxu0 0
    %1436 = vmatprep.subr.bf16.mxu0 0
    %1437 = vmatpush1.bf16.xpose.msra.mxu0 0
    %1438 = vmatprep.subr.bf16.mxu0 0
    %1439 = vmatpush1.bf16.xpose.msra.mxu0 0
    %1440 = vmatprep.subr.bf16.mxu0 0
    %1441 = vmatpush1.bf16.xpose.msra.mxu0 0
    %1442 = vmatprep.subr.bf16.mxu0 0
    %1443 = vmatpush1.bf16.xpose.msra.mxu0 0
    %1444 = vmatprep.subr.bf16.mxu0 0
    %1445 = vmatpush1.bf16.xpose.msra.mxu0 0
    %1446 = vmatprep.subr.bf16.mxu0 0
    %1447 = vmatpush1.bf16.xpose.msra.mxu0 0
    %1448 = vmatprep.subr.bf16.mxu0 0
    %1449 = vmatpush1.bf16.xpose.msra.mxu0 0
    %1450 = vmatprep.subr.bf16.mxu0 0
    %1451 = vmatpush1.bf16.xpose.msra.mxu0 0
    %1452 = vmatprep.subr.bf16.mxu0 0
    %1453 = vmatpush1.bf16.xpose.msra.mxu0 0
    %1454 = vmatprep.subr.bf16.mxu0 0
    %1455 = vmatpush1.bf16.xpose.msra.mxu0 0
    %1456 = vmatprep.subr.bf16.mxu0 0
    %1457 = vmatpush1.bf16.xpose.msra.mxu0 0
    %1458 = vmatprep.subr.bf16.mxu0 0
    %1459 = vmatpush1.bf16.xpose.msra.mxu0 0
    %1460 = vmatprep.mubr.bf16.mxu0 0
    %1461 = vmatmul.mubr.bf16.gmra.mrb[0].mxu0 %v1423
    %v1462 = vpop.f32.mrb[0].mxu0
    %v1463 = vadd.f32 0.0, %v1462
    %v1464 = vpop.f32.mrb[0].mxu0
    %v1465 = vpop.f32.mrb[0].mxu0
    %v1466 = vadd.f32 0.0, %v1465
    %v1467 = vpop.f32.mrb[0].mxu0
    %1468 = vdwg.mxu0
    %v1469 = vadd.f32 %v1310, %v237
    %v1470 = vadd.f32 %v1313, %v238
    %v1471 = vadd.f32 %v1361, %v239
    %v1472 = vadd.f32 %v1364, %v240
    %v1473 = vadd.f32 %v1412, %v241
    %v1474 = vadd.f32 %v1415, %v242
    %v1475 = vadd.f32 %v1463, %v243
    %v1476 = vadd.f32 %v1466, %v244
    %v1477 = vsel %vm565, %v1469, -inf
    %1478 = vmax.xlane.f32.xlu0 %v1477
    %v1479 = vpop.xlane.xlu0 %1478
    %v1480 = vsel %vm565, %v1470, -inf
    %1481 = vmax.xlane.f32.xlu0 %v1480
    %v1482 = vpop.xlane.xlu0 %1481
    %v1483 = vsel %vm565, %v1471, -inf
    %1484 = vmax.xlane.f32.xlu0 %v1483
    %v1485 = vpop.xlane.xlu0 %1484
    %v1486 = vsel %vm565, %v1472, -inf
    %1487 = vmax.xlane.f32.xlu0 %v1486
    %v1488 = vpop.xlane.xlu0 %1487
    %v1489 = vsel %vm565, %v1473, -inf
    %1490 = vmax.xlane.f32.xlu0 %v1489
    %v1491 = vpop.xlane.xlu0 %1490
    %v1492 = vsel %vm565, %v1474, -inf
    %1493 = vmax.xlane.f32.xlu0 %v1492
    %v1494 = vpop.xlane.xlu0 %1493
    %v1495 = vsel %vm565, %v1475, -inf
    %1496 = vmax.xlane.f32.xlu0 %v1495
    %v1497 = vpop.xlane.xlu0 %1496
    %v1498 = vsel %vm565, %v1476, -inf
    %1499 = vmax.xlane.f32.xlu0 %v1498
    %v1500 = vpop.xlane.xlu0 %1499
    %v1501 = vsub.f32 %v1469, %v1479
    %v1502 = vsub.f32 %v1470, %v1482
    %v1503 = vsub.f32 %v1471, %v1485
    %v1504 = vsub.f32 %v1472, %v1488
    %v1505 = vsub.f32 %v1473, %v1491
    %v1506 = vsub.f32 %v1474, %v1494
    %v1507 = vsub.f32 %v1475, %v1497
    %v1508 = vsub.f32 %v1476, %v1500
    %v1509 = vmul.f32 %v1501, 1.442695
    %v1510 = vpow.pop %v1509
    %v1511 = vmul.f32 %v1502, 1.442695
    %v1512 = vpow.pop %v1511
    %v1513 = vmul.f32 %v1503, 1.442695
    %v1514 = vpow.pop %v1513
    %v1515 = vmul.f32 %v1504, 1.442695
    %v1516 = vpow.pop %v1515
    %v1517 = vmul.f32 %v1505, 1.442695
    %v1518 = vpow.pop %v1517
    %v1519 = vmul.f32 %v1506, 1.442695
    %v1520 = vpow.pop %v1519
    %v1521 = vmul.f32 %v1507, 1.442695
    %v1522 = vpow.pop %v1521
    %v1523 = vmul.f32 %v1508, 1.442695
    %v1524 = vpow.pop %v1523
    %v1525 = vsel %vm565, %v1510, 0.0
    %1526 = vadd.xlane.f32.xlu0 %v1525
    %v1527 = vpop.xlane.xlu0 %1526
    %v1528 = vsel %vm565, %v1512, 0.0
    %1529 = vadd.xlane.f32.xlu0 %v1528
    %v1530 = vpop.xlane.xlu0 %1529
    %v1531 = vsel %vm565, %v1514, 0.0
    %1532 = vadd.xlane.f32.xlu0 %v1531
    %v1533 = vpop.xlane.xlu0 %1532
    %v1534 = vsel %vm565, %v1516, 0.0
    %1535 = vadd.xlane.f32.xlu0 %v1534
    %v1536 = vpop.xlane.xlu0 %1535
    %v1537 = vsel %vm565, %v1518, 0.0
    %1538 = vadd.xlane.f32.xlu0 %v1537
    %v1539 = vpop.xlane.xlu0 %1538
    %v1540 = vsel %vm565, %v1520, 0.0
    %1541 = vadd.xlane.f32.xlu0 %v1540
    %v1542 = vpop.xlane.xlu0 %1541
    %v1543 = vsel %vm565, %v1522, 0.0
    %1544 = vadd.xlane.f32.xlu0 %v1543
    %v1545 = vpop.xlane.xlu0 %1544
    %v1546 = vsel %vm565, %v1524, 0.0
    %1547 = vadd.xlane.f32.xlu0 %v1546
    %v1548 = vpop.xlane.xlu0 %1547
    %v1549 = vrcp.pop %v1527
    %v1550 = vrcp.pop %v1530
    %v1551 = vrcp.pop %v1533
    %v1552 = vrcp.pop %v1536
    %v1553 = vrcp.pop %v1539
    %v1554 = vrcp.pop %v1542
    %v1555 = vrcp.pop %v1545
    %v1556 = vrcp.pop %v1548
    %v1557 = vpack.c.bf16 %v1512, %v1510
    %v1558 = vpack.c.bf16 %v1516, %v1514
    %v1559 = vpack.c.bf16 %v1520, %v1518
    %v1560 = vpack.c.bf16 %v1524, %v1522
    %1561 = vrot.lane.b32.xlu0 %v1265, 64
    %v1562 = vpop.permute.xlu0 %1561
    %v1565 = vsel %vm565, %v1557, 0
    %1567 = vmatprep.subr.bf16.mxu0 0
    %1568 = vmatpush1.bf16.msra.mxu0 %v1562
    %1569 = vmatprep.subr.bf16.mxu0 0
    %1570 = vmatpush1.bf16.msra.mxu0 0
    %1571 = vmatprep.subr.bf16.mxu0 0
    %1572 = vmatpush1.bf16.msra.mxu0 0
    %1573 = vmatprep.subr.bf16.mxu0 0
    %1574 = vmatpush1.bf16.msra.mxu0 0
    %1575 = vmatprep.subr.bf16.mxu0 0
    %1576 = vmatpush1.bf16.msra.mxu0 0
    %1577 = vmatprep.subr.bf16.mxu0 0
    %1578 = vmatpush1.bf16.msra.mxu0 0
    %1579 = vmatprep.subr.bf16.mxu0 0
    %1580 = vmatpush1.bf16.msra.mxu0 0
    %1581 = vmatprep.subr.bf16.mxu0 0
    %1582 = vmatpush1.bf16.msra.mxu0 0
    %1583 = vmatprep.subr.bf16.mxu0 0
    %1584 = vmatpush1.bf16.msra.mxu0 0
    %1585 = vmatprep.subr.bf16.mxu0 0
    %1586 = vmatpush1.bf16.msra.mxu0 0
    %1587 = vmatprep.subr.bf16.mxu0 0
    %1588 = vmatpush1.bf16.msra.mxu0 0
    %1589 = vmatprep.subr.bf16.mxu0 0
    %1590 = vmatpush1.bf16.msra.mxu0 0
    %1591 = vmatprep.subr.bf16.mxu0 0
    %1592 = vmatpush1.bf16.msra.mxu0 0
    %1593 = vmatprep.subr.bf16.mxu0 0
    %1594 = vmatpush1.bf16.msra.mxu0 0
    %1595 = vmatprep.subr.bf16.mxu0 0
    %1596 = vmatpush1.bf16.msra.mxu0 0
    %1597 = vmatprep.subr.bf16.mxu0 0
    %1598 = vmatpush1.bf16.msra.mxu0 0
    %1599 = vmatprep.mubr.bf16.mxu0 0
    %1600 = vmatmul.mubr.bf16.gmra.mrb[0].mxu0 %v1565
    %v1601 = vpop.f32.mrb[0].mxu0
    %v1602 = vadd.f32 0.0, %v1601
    %v1603 = vpop.f32.mrb[0].mxu0
    %v1604 = vpop.f32.mrb[0].mxu0
    %v1605 = vadd.f32 0.0, %v1604
    %v1606 = vpop.f32.mrb[0].mxu0
    %1607 = vdwg.mxu0
    %v1608 = vmul.f32 %v1602, %v1549
    %v1609 = vmul.f32 %v1605, %v1550
    %1610 = vrot.lane.b32.xlu0 %v1265, 56
    %v1611 = vpop.permute.xlu0 %1610
    %v1614 = vsel %vm565, %v1558, 0
    %1616 = vmatprep.subr.bf16.mxu0 0
    %1617 = vmatpush1.bf16.msra.mxu0 %v1611
    %1618 = vmatprep.subr.bf16.mxu0 0
    %1619 = vmatpush1.bf16.msra.mxu0 0
    %1620 = vmatprep.subr.bf16.mxu0 0
    %1621 = vmatpush1.bf16.msra.mxu0 0
    %1622 = vmatprep.subr.bf16.mxu0 0
    %1623 = vmatpush1.bf16.msra.mxu0 0
    %1624 = vmatprep.subr.bf16.mxu0 0
    %1625 = vmatpush1.bf16.msra.mxu0 0
    %1626 = vmatprep.subr.bf16.mxu0 0
    %1627 = vmatpush1.bf16.msra.mxu0 0
    %1628 = vmatprep.subr.bf16.mxu0 0
    %1629 = vmatpush1.bf16.msra.mxu0 0
    %1630 = vmatprep.subr.bf16.mxu0 0
    %1631 = vmatpush1.bf16.msra.mxu0 0
    %1632 = vmatprep.subr.bf16.mxu0 0
    %1633 = vmatpush1.bf16.msra.mxu0 0
    %1634 = vmatprep.subr.bf16.mxu0 0
    %1635 = vmatpush1.bf16.msra.mxu0 0
    %1636 = vmatprep.subr.bf16.mxu0 0
    %1637 = vmatpush1.bf16.msra.mxu0 0
    %1638 = vmatprep.subr.bf16.mxu0 0
    %1639 = vmatpush1.bf16.msra.mxu0 0
    %1640 = vmatprep.subr.bf16.mxu0 0
    %1641 = vmatpush1.bf16.msra.mxu0 0
    %1642 = vmatprep.subr.bf16.mxu0 0
    %1643 = vmatpush1.bf16.msra.mxu0 0
    %1644 = vmatprep.subr.bf16.mxu0 0
    %1645 = vmatpush1.bf16.msra.mxu0 0
    %1646 = vmatprep.subr.bf16.mxu0 0
    %1647 = vmatpush1.bf16.msra.mxu0 0
    %1648 = vmatprep.mubr.bf16.mxu0 0
    %1649 = vmatmul.mubr.bf16.gmra.mrb[0].mxu0 %v1614
    %v1650 = vpop.f32.mrb[0].mxu0
    %v1651 = vadd.f32 0.0, %v1650
    %v1652 = vpop.f32.mrb[0].mxu0
    %v1653 = vpop.f32.mrb[0].mxu0
    %v1654 = vadd.f32 0.0, %v1653
    %v1655 = vpop.f32.mrb[0].mxu0
    %1656 = vdwg.mxu0
    %v1657 = vmul.f32 %v1651, %v1551
    %v1658 = vmul.f32 %v1654, %v1552
    %1659 = vrot.lane.b32.xlu0 %v1265, 48
    %v1660 = vpop.permute.xlu0 %1659
    %v1663 = vsel %vm565, %v1559, 0
    %1665 = vmatprep.subr.bf16.mxu0 0
    %1666 = vmatpush1.bf16.msra.mxu0 %v1660
    %1667 = vmatprep.subr.bf16.mxu0 0
    %1668 = vmatpush1.bf16.msra.mxu0 0
    %1669 = vmatprep.subr.bf16.mxu0 0
    %1670 = vmatpush1.bf16.msra.mxu0 0
    %1671 = vmatprep.subr.bf16.mxu0 0
    %1672 = vmatpush1.bf16.msra.mxu0 0
    %1673 = vmatprep.subr.bf16.mxu0 0
    %1674 = vmatpush1.bf16.msra.mxu0 0
    %1675 = vmatprep.subr.bf16.mxu0 0
    %1676 = vmatpush1.bf16.msra.mxu0 0
    %1677 = vmatprep.subr.bf16.mxu0 0
    %1678 = vmatpush1.bf16.msra.mxu0 0
    %1679 = vmatprep.subr.bf16.mxu0 0
    %1680 = vmatpush1.bf16.msra.mxu0 0
    %1681 = vmatprep.subr.bf16.mxu0 0
    %1682 = vmatpush1.bf16.msra.mxu0 0
    %1683 = vmatprep.subr.bf16.mxu0 0
    %1684 = vmatpush1.bf16.msra.mxu0 0
    %1685 = vmatprep.subr.bf16.mxu0 0
    %1686 = vmatpush1.bf16.msra.mxu0 0
    %1687 = vmatprep.subr.bf16.mxu0 0
    %1688 = vmatpush1.bf16.msra.mxu0 0
    %1689 = vmatprep.subr.bf16.mxu0 0
    %1690 = vmatpush1.bf16.msra.mxu0 0
    %1691 = vmatprep.subr.bf16.mxu0 0
    %1692 = vmatpush1.bf16.msra.mxu0 0
    %1693 = vmatprep.subr.bf16.mxu0 0
    %1694 = vmatpush1.bf16.msra.mxu0 0
    %1695 = vmatprep.subr.bf16.mxu0 0
    %1696 = vmatpush1.bf16.msra.mxu0 0
    %1697 = vmatprep.mubr.bf16.mxu0 0
    %1698 = vmatmul.mubr.bf16.gmra.mrb[0].mxu0 %v1663
    %v1699 = vpop.f32.mrb[0].mxu0
    %v1700 = vadd.f32 0.0, %v1699
    %v1701 = vpop.f32.mrb[0].mxu0
    %v1702 = vpop.f32.mrb[0].mxu0
    %v1703 = vadd.f32 0.0, %v1702
    %v1704 = vpop.f32.mrb[0].mxu0
    %1705 = vdwg.mxu0
    %v1706 = vmul.f32 %v1700, %v1553
    %v1707 = vmul.f32 %v1703, %v1554
    %1708 = vrot.lane.b32.xlu0 %v1265, 40
    %v1709 = vpop.permute.xlu0 %1708
    %v1712 = vsel %vm565, %v1560, 0
    %1714 = vmatprep.subr.bf16.mxu0 0
    %1715 = vmatpush1.bf16.msra.mxu0 %v1709
    %1716 = vmatprep.subr.bf16.mxu0 0
    %1717 = vmatpush1.bf16.msra.mxu0 0
    %1718 = vmatprep.subr.bf16.mxu0 0
    %1719 = vmatpush1.bf16.msra.mxu0 0
    %1720 = vmatprep.subr.bf16.mxu0 0
    %1721 = vmatpush1.bf16.msra.mxu0 0
    %1722 = vmatprep.subr.bf16.mxu0 0
    %1723 = vmatpush1.bf16.msra.mxu0 0
    %1724 = vmatprep.subr.bf16.mxu0 0
    %1725 = vmatpush1.bf16.msra.mxu0 0
    %1726 = vmatprep.subr.bf16.mxu0 0
    %1727 = vmatpush1.bf16.msra.mxu0 0
    %1728 = vmatprep.subr.bf16.mxu0 0
    %1729 = vmatpush1.bf16.msra.mxu0 0
    %1730 = vmatprep.subr.bf16.mxu0 0
    %1731 = vmatpush1.bf16.msra.mxu0 0
    %1732 = vmatprep.subr.bf16.mxu0 0
    %1733 = vmatpush1.bf16.msra.mxu0 0
    %1734 = vmatprep.subr.bf16.mxu0 0
    %1735 = vmatpush1.bf16.msra.mxu0 0
    %1736 = vmatprep.subr.bf16.mxu0 0
    %1737 = vmatpush1.bf16.msra.mxu0 0
    %1738 = vmatprep.subr.bf16.mxu0 0
    %1739 = vmatpush1.bf16.msra.mxu0 0
    %1740 = vmatprep.subr.bf16.mxu0 0
    %1741 = vmatpush1.bf16.msra.mxu0 0
    %1742 = vmatprep.subr.bf16.mxu0 0
    %1743 = vmatpush1.bf16.msra.mxu0 0
    %1744 = vmatprep.subr.bf16.mxu0 0
    %1745 = vmatpush1.bf16.msra.mxu0 0
    %1746 = vmatprep.mubr.bf16.mxu0 0
    %1747 = vmatmul.mubr.bf16.gmra.mrb[0].mxu0 %v1712
    %v1748 = vpop.f32.mrb[0].mxu0
    %v1749 = vadd.f32 0.0, %v1748
    %v1750 = vpop.f32.mrb[0].mxu0
    %v1751 = vpop.f32.mrb[0].mxu0
    %v1752 = vadd.f32 0.0, %v1751
    %v1753 = vpop.f32.mrb[0].mxu0
    %1754 = vdwg.mxu0
    %v1755 = vmul.f32 %v1749, %v1555
    %v1756 = vmul.f32 %v1752, %v1556
    %1759 = vrot.lane.b32.xlu0 %v1657, 8
    %v1760 = vpop.permute.xlu0 %1759
    %1761 = vrot.lane.b32.xlu0 %v1658, 8
    %v1762 = vpop.permute.xlu0 %1761
    %1767 = vrot.lane.b32.xlu0 %v1706, 16
    %v1768 = vpop.permute.xlu0 %1767
    %1769 = vrot.lane.b32.xlu0 %v1707, 16
    %v1770 = vpop.permute.xlu0 %1769
    %1775 = vrot.lane.b32.xlu0 %v1755, 24
    %v1776 = vpop.permute.xlu0 %1775
    %1777 = vrot.lane.b32.xlu0 %v1756, 24
    %v1778 = vpop.permute.xlu0 %1777
    %v1781 = vsel %vm356, %v1608, %v1760
    %v1782 = vsel %vm356, %v1609, %v1762
    %v1783 = vsel %vm565, %v1781, %v1768
    %v1784 = vsel %vm565, %v1782, %v1770
    %v1785 = vsel %vm874, %v1783, %v1776
    %v1786 = vsel %vm874, %v1784, %v1778
    %v1787 = vpack.c.bf16 %v1786, %v1785
    %v1788 = vld [vmem:[#allocation20] sm:$0xf]
    %v1789 = vld [vmem:[#allocation20 + $0x4] sm:$0xf]
    %v1790 = vld [vmem:[#allocation20 + $0x8] sm:$0xf]
    %v1791 = vld [vmem:[#allocation20 + $0xc] sm:$0xf]
    %v1796 = vunpack.c.l.b16 %v1788
    %v1797 = vunpack.c.l.b16 %v1789
    %v1798 = vunpack.c.l.b16 %v1790
    %v1799 = vunpack.c.l.b16 %v1791
    %v1800 = vpack.c.b16 %v1797, %v1796
    %v1801 = vpack.c.b16 %v1799, %v1798
    %v1805 = vsel %vm247, %v1787, 0
    %1807 = vmatprep.subr.bf16.mxu0 0
    %1808 = vmatpush1.bf16.msra.mxu0 %v1800
    %1809 = vmatprep.subr.bf16.mxu0 0
    %1810 = vmatpush1.bf16.msra.mxu0 %v1801
    %1811 = vmatprep.subr.bf16.mxu0 0
    %1812 = vmatpush1.bf16.msra.mxu0 0
    %1813 = vmatprep.subr.bf16.mxu0 0
    %1814 = vmatpush1.bf16.msra.mxu0 0
    %1815 = vmatprep.subr.bf16.mxu0 0
    %1816 = vmatpush1.bf16.msra.mxu0 0
    %1817 = vmatprep.subr.bf16.mxu0 0
    %1818 = vmatpush1.bf16.msra.mxu0 0
    %1819 = vmatprep.subr.bf16.mxu0 0
    %1820 = vmatpush1.bf16.msra.mxu0 0
    %1821 = vmatprep.subr.bf16.mxu0 0
    %1822 = vmatpush1.bf16.msra.mxu0 0
    %1823 = vmatprep.subr.bf16.mxu0 0
    %1824 = vmatpush1.bf16.msra.mxu0 0
    %1825 = vmatprep.subr.bf16.mxu0 0
    %1826 = vmatpush1.bf16.msra.mxu0 0
    %1827 = vmatprep.subr.bf16.mxu0 0
    %1828 = vmatpush1.bf16.msra.mxu0 0
    %1829 = vmatprep.subr.bf16.mxu0 0
    %1830 = vmatpush1.bf16.msra.mxu0 0
    %1831 = vmatprep.subr.bf16.mxu0 0
    %1832 = vmatpush1.bf16.msra.mxu0 0
    %1833 = vmatprep.subr.bf16.mxu0 0
    %1834 = vmatpush1.bf16.msra.mxu0 0
    %1835 = vmatprep.subr.bf16.mxu0 0
    %1836 = vmatpush1.bf16.msra.mxu0 0
    %1837 = vmatprep.subr.bf16.mxu0 0
    %1838 = vmatpush1.bf16.msra.mxu0 0
    %1839 = vmatprep.mubr.bf16.mxu0 0
    %1840 = vmatmul.mubr.bf16.gmra.mrb[0].mxu0 %v1805
    %v1841 = vpop.f32.mrb[0].mxu0
    %v1842 = vadd.f32 0.0, %v1841
    %v1843 = vpop.f32.mrb[0].mxu0
    %v1844 = vpop.f32.mrb[0].mxu0
    %v1845 = vadd.f32 0.0, %v1844
    %v1846 = vpop.f32.mrb[0].mxu0
    %1847 = vdwg.mxu0
    %v1848 = vadd.f32 %v1158, %v1842
    %v1849 = vadd.f32 %v1159, %v1845
    %v1850 = vld [vmem:[#allocation22] sm:$0x1]
    %v1852 = vlaneseq
    %v1853 = vshrl.u32 %v1852, 7
    %v1854 = vsub.s32 0, %v1853
    %v1855 = vrot.slane %v1850, %v1854
    %v1857 = vadd.f32 %v1848, %v1855
    %v1858 = vadd.f32 %v1849, %v1855
    %v1859 = vld [vmem:[%s18] sm:$0x1]
    %v1860 = vld [vmem:[%s19] sm:$0x1]
    %v1861 = vsel %vm247, %v1857, 0.0
    %1862 = vadd.xlane.f32.xlu0 %v1861
    %v1863 = vpop.xlane.xlu0 %1862
    %v1864 = vsel %vm247, %v1858, 0.0
    %1865 = vadd.xlane.f32.xlu0 %v1864
    %v1866 = vpop.xlane.xlu0 %1865
    %v1867 = vmul.f32 %v1863, %v254
    %v1868 = vmul.f32 %v1866, %v254
    %v1869 = vsub.f32 %v1857, %v1867
    %v1870 = vsub.f32 %v1858, %v1868
    %v1871 = vmul.f32 %v1869, %v1869
    %v1872 = vmul.f32 %v1870, %v1870
    %v1873 = vsel %vm247, %v1871, 0.0
    %1874 = vadd.xlane.f32.xlu0 %v1873
    %v1875 = vpop.xlane.xlu0 %1874
    %v1876 = vsel %vm247, %v1872, 0.0
    %1877 = vadd.xlane.f32.xlu0 %v1876
    %v1878 = vpop.xlane.xlu0 %1877
    %v1879 = vmul.f32 %v1875, %v254
    %v1880 = vmul.f32 %v1878, %v254
    %v1881 = vadd.f32 %v1879, 1e-05
    %v1882 = vadd.f32 %v1880, 1e-05
    %v1883 = vrsqrt.pop %v1881
    %v1884 = vrsqrt.pop %v1882
    %v1885 = vmul.f32 %v1869, %v1883
    %v1886 = vmul.f32 %v1870, %v1884
    %v1888 = vlaneseq
    %v1889 = vshrl.u32 %v1888, 7
    %v1890 = vsub.s32 0, %v1889
    %v1891 = vrot.slane %v1859, %v1890
    %v1893 = vmul.f32 %v1885, %v1891
    %v1894 = vmul.f32 %v1886, %v1891
    %v1896 = vlaneseq
    %v1897 = vshrl.u32 %v1896, 7
    %v1898 = vsub.s32 0, %v1897
    %v1899 = vrot.slane %v1860, %v1898
    %v1901 = vadd.f32 %v1893, %v1899
    %v1902 = vadd.f32 %v1894, %v1899
    %v1903 = vpack.c.bf16 %v1902, %v1901
    %v1904 = vld [vmem:[%s20] sm:$0xf]
    %v1905 = vld [vmem:[%s20 + $0x4] sm:$0xf]
    %v1906 = vld [vmem:[%s20 + $0x8] sm:$0xf]
    %v1907 = vld [vmem:[%s20 + $0xc] sm:$0xf]
    %v1908 = vld [vmem:[%s21] sm:$0x1]
    %v1910 = vlaneseq
    %v1911 = vshrl.u32 %v1910, 7
    %v1912 = vsub.s32 0, %v1911
    %v1913 = vrot.slane %v1908, %v1912
    %v1919 = vunpack.c.l.b16 %v1904
    %v1920 = vunpack.c.l.b16 %v1905
    %v1921 = vunpack.c.l.b16 %v1906
    %v1922 = vunpack.c.l.b16 %v1907
    %v1923 = vpack.c.b16 %v1920, %v1919
    %v1924 = vpack.c.b16 %v1922, %v1921
    %v1928 = vsel %vm247, %v1903, 0
    %1930 = vmatprep.subr.bf16.mxu0 0
    %1931 = vmatpush1.bf16.msra.mxu0 %v1923
    %1932 = vmatprep.subr.bf16.mxu0 0
    %1933 = vmatpush1.bf16.msra.mxu0 %v1924
    %1934 = vmatprep.subr.bf16.mxu0 0
    %1935 = vmatpush1.bf16.msra.mxu0 0
    %1936 = vmatprep.subr.bf16.mxu0 0
    %1937 = vmatpush1.bf16.msra.mxu0 0
    %1938 = vmatprep.subr.bf16.mxu0 0
    %1939 = vmatpush1.bf16.msra.mxu0 0
    %1940 = vmatprep.subr.bf16.mxu0 0
    %1941 = vmatpush1.bf16.msra.mxu0 0
    %1942 = vmatprep.subr.bf16.mxu0 0
    %1943 = vmatpush1.bf16.msra.mxu0 0
    %1944 = vmatprep.subr.bf16.mxu0 0
    %1945 = vmatpush1.bf16.msra.mxu0 0
    %1946 = vmatprep.subr.bf16.mxu0 0
    %1947 = vmatpush1.bf16.msra.mxu0 0
    %1948 = vmatprep.subr.bf16.mxu0 0
    %1949 = vmatpush1.bf16.msra.mxu0 0
    %1950 = vmatprep.subr.bf16.mxu0 0
    %1951 = vmatpush1.bf16.msra.mxu0 0
    %1952 = vmatprep.subr.bf16.mxu0 0
    %1953 = vmatpush1.bf16.msra.mxu0 0
    %1954 = vmatprep.subr.bf16.mxu0 0
    %1955 = vmatpush1.bf16.msra.mxu0 0
    %1956 = vmatprep.subr.bf16.mxu0 0
    %1957 = vmatpush1.bf16.msra.mxu0 0
    %1958 = vmatprep.subr.bf16.mxu0 0
    %1959 = vmatpush1.bf16.msra.mxu0 0
    %1960 = vmatprep.subr.bf16.mxu0 0
    %1961 = vmatpush1.bf16.msra.mxu0 0
    %1962 = vmatprep.mubr.bf16.mxu0 0
    %1963 = vmatmul.mubr.bf16.gmra.mrb[0].mxu0 %v1928
    %v1964 = vpop.f32.mrb[0].mxu0
    %v1965 = vadd.f32 %v1913, %v1964
    %v1966 = vpop.f32.mrb[0].mxu0
    %v1967 = vpop.f32.mrb[0].mxu0
    %v1968 = vadd.f32 %v1913, %v1967
    %v1969 = vpop.f32.mrb[0].mxu0
    %1970 = vdwg.mxu0
    %v1971 = vmul.f32 %v1965, 0.5
    %v1972 = vmul.f32 %v1968, 0.5
    %v1973 = vmul.f32 %v1965, 0.70710677
    %v1974 = vmul.f32 %v1968, 0.70710677
    %v1975 = verf.f32.pop %v1973
    %v1976 = verf.f32.pop %v1974
    %v1977 = vadd.f32 %v1975, 1.0
    %v1978 = vadd.f32 %v1976, 1.0
    %v1979 = vmul.f32 %v1971, %v1977
    %v1980 = vmul.f32 %v1972, %v1978
    %v1981 = vpack.c.bf16 %v1980, %v1979
    %v1982 = vld [vmem:[%s22] sm:$0xf]
    %v1983 = vld [vmem:[%s22 + $0x4] sm:$0xf]
    %v1984 = vld [vmem:[%s22 + $0x8] sm:$0xf]
    %v1985 = vld [vmem:[%s22 + $0xc] sm:$0xf]
    %v1986 = vld [vmem:[%s22 + $0x10] sm:$0xf]
    %v1987 = vld [vmem:[%s22 + $0x14] sm:$0xf]
    %v1988 = vld [vmem:[%s22 + $0x18] sm:$0xf]
    %v1989 = vld [vmem:[%s22 + $0x1c] sm:$0xf]
    %v1998 = vunpack.c.l.b16 %v1982
    %v1999 = vunpack.c.l.b16 %v1983
    %v2000 = vunpack.c.l.b16 %v1984
    %v2001 = vunpack.c.l.b16 %v1985
    %v2002 = vunpack.c.l.b16 %v1986
    %v2003 = vunpack.c.l.b16 %v1987
    %v2004 = vunpack.c.l.b16 %v1988
    %v2005 = vunpack.c.l.b16 %v1989
    %v2006 = vpack.c.b16 %v1999, %v1998
    %v2007 = vpack.c.b16 %v2001, %v2000
    %v2008 = vpack.c.b16 %v2003, %v2002
    %v2009 = vpack.c.b16 %v2005, %v2004
    %v2015 = vsel %vm1104, %v1981, 0
    %2017 = vmatprep.subr.bf16.mxu0 0
    %2018 = vmatpush1.bf16.msra.mxu0 %v2006
    %2019 = vmatprep.subr.bf16.mxu0 0
    %2020 = vmatpush1.bf16.msra.mxu0 %v2007
    %2021 = vmatprep.subr.bf16.mxu0 0
    %2022 = vmatpush1.bf16.msra.mxu0 %v2008
    %2023 = vmatprep.subr.bf16.mxu0 0
    %2024 = vmatpush1.bf16.msra.mxu0 %v2009
    %2025 = vmatprep.subr.bf16.mxu0 0
    %2026 = vmatpush1.bf16.msra.mxu0 0
    %2027 = vmatprep.subr.bf16.mxu0 0
    %2028 = vmatpush1.bf16.msra.mxu0 0
    %2029 = vmatprep.subr.bf16.mxu0 0
    %2030 = vmatpush1.bf16.msra.mxu0 0
    %2031 = vmatprep.subr.bf16.mxu0 0
    %2032 = vmatpush1.bf16.msra.mxu0 0
    %2033 = vmatprep.subr.bf16.mxu0 0
    %2034 = vmatpush1.bf16.msra.mxu0 0
    %2035 = vmatprep.subr.bf16.mxu0 0
    %2036 = vmatpush1.bf16.msra.mxu0 0
    %2037 = vmatprep.subr.bf16.mxu0 0
    %2038 = vmatpush1.bf16.msra.mxu0 0
    %2039 = vmatprep.subr.bf16.mxu0 0
    %2040 = vmatpush1.bf16.msra.mxu0 0
    %2041 = vmatprep.subr.bf16.mxu0 0
    %2042 = vmatpush1.bf16.msra.mxu0 0
    %2043 = vmatprep.subr.bf16.mxu0 0
    %2044 = vmatpush1.bf16.msra.mxu0 0
    %2045 = vmatprep.subr.bf16.mxu0 0
    %2046 = vmatpush1.bf16.msra.mxu0 0
    %2047 = vmatprep.subr.bf16.mxu0 0
    %2048 = vmatpush1.bf16.msra.mxu0 0
    %2049 = vmatprep.mubr.bf16.mxu0 0
    %2050 = vmatmul.mubr.bf16.gmra.mrb[0].mxu0 %v2015
    %v2051 = vpop.f32.mrb[0].mxu0
    %v2052 = vadd.f32 0.0, %v2051
    %v2053 = vpop.f32.mrb[0].mxu0
    %v2054 = vpop.f32.mrb[0].mxu0
    %v2055 = vadd.f32 0.0, %v2054
    %v2056 = vpop.f32.mrb[0].mxu0
    %2057 = vdwg.mxu0
    %v2058 = vadd.f32 %v1857, %v2052
    %v2059 = vadd.f32 %v1858, %v2055
    %v2060 = vld [vmem:[%s23] sm:$0x1]
    %v2062 = vlaneseq
    %v2063 = vshrl.u32 %v2062, 7
    %v2064 = vsub.s32 0, %v2063
    %v2065 = vrot.slane %v2060, %v2064
    %v2067 = vadd.f32 %v2058, %v2065
    %v2068 = vadd.f32 %v2059, %v2065
    %2069 = vst.msk [vmem:[#allocation23] sm:$0xff] %vm247, %v2067
    %2070 = vst.msk [vmem:[#allocation23 + $0x8] sm:$0xff] %vm247, %v2068
    // Predicated region
    $region150: #{transformer_forward.1} parent=1 // pred_check
      _
    $region151: #{transformer_forward.1} parent=1 // pred_check_branch
      %2072 = sbr.rel (0) target = $region153
    $region152: #{transformer_forward.1} parent=1 // pred_region
      %s2074 = ssub.s32 256, 256
      %2075 = vsyncadd [#allocation4], %s2074
      %s2076 = sshll.u32 [#allocation23], 4
      %s2077 = int_to_ptr.vmem [resolvable:$true] %s2076
      %2082 = dma.vmem_to_hbm [thread:$0]  %s2077, 256, %s24, [#allocation4], 128, 128, 8
    $region153: #{transformer_forward.1} parent=1 // pred_fallthru
      _
    // Predicated region
    $region154: #{transformer_forward.1} parent=1 // pred_check
      _
    $region155: #{transformer_forward.1} parent=1 // pred_check_branch
      %2084 = sbr.rel (0) target = $region157
    $region156: #{transformer_forward.1} parent=1 // pred_region
      %2085 = dma.done [#allocation4], 256
    $region157: #{transformer_forward.1} parent=1 // pred_fallthru
      _
    %2086 = vsyncpa [#allocation3], 1
    %2087 = vsyncpa [#allocation6], 1
    %2088 = vsyncpa [#allocation9], 1
    %2089 = vsyncpa [#allocation12], 1
    %2090 = vsyncpa [#allocation15], 1
    %2091 = vsyncpa [#allocation18], 1
    %2092 = vsyncpa [#allocation21], 1
    %2093 = vsyncpa [#allocation4], 1

</llo_original>
